<compile_context>
chip_gen: v6e
topology: v6e:2x2x1
jax: 0.10.0
libtpu: 0.0.40
codegen_flags: <defaults>
</compile_context>

<pallas_src>
import math

import jax
import jax.numpy as jnp
from jax.experimental import pallas as pl
from jax.experimental.pallas import tpu as pltpu


# ---------------------------------------------------------------------------
# Pallas kernel: one fused PositionGraphConv layer (concat=True, dist_only=False)
# ---------------------------------------------------------------------------
def _pgc_kernel(gat_ref, dmax_ref, feat_ref,
                w1t_ref, w1b_ref, b1_ref, w2_ref, b2_ref,
                packed_ref):
    # gat_ref  : (TN, K, F)      gathered anchor features
    # dmax_ref : (TN, K, 1)      dist_max
    # feat_ref : (TN, F)         per-node ("self") features
    # w1t_ref  : (F, 2H)         fused layer-1 weight, rows acting on gathered feats
    # w1b_ref  : (F, 2H)         fused layer-1 weight, rows acting on self feats
    # b1_ref   : (1, 2H)
    # w2_ref   : (2H, Dout+1)    block-diag layer-2: cols [0:Dout] hidden (1/K folded),
    #                            col Dout = out-MLP head
    # b2_ref   : (1, Dout+1)
    # packed_ref: (TN, Dout+K)   [hidden || out]
    dout = w2_ref.shape[1] - 1
    mm_dtype = w1t_ref.dtype

    dmax = dmax_ref[...]                                             # (TN, K, 1) f32
    gm = gat_ref[...] * dmax                                         # (TN, K, F) f32

    # ---- fused layer 1 (both MLPs), self half computed once per node ----
    gat_part = jnp.einsum('nkf,fh->nkh', gm.astype(mm_dtype), w1t_ref[...],
                          preferred_element_type=jnp.float32)        # (TN, K, 2H)
    self_part = jnp.dot(feat_ref[...].astype(mm_dtype), w1b_ref[...],
                        preferred_element_type=jnp.float32)          # (TN, 2H)
    h = gat_part + dmax * self_part[:, None, :] + b1_ref[...]
    h = jnp.maximum(h, 0.0)                                          # (TN, K, 2H) f32

    # ---- fused block-diagonal layer 2 (out head folded into the MXU) ----
    fin = jnp.einsum('nkh,hd->nkd', h.astype(mm_dtype), w2_ref[...],
                     preferred_element_type=jnp.float32) + b2_ref[...]  # (TN, K, Dout+1)
    hid = jnp.sum(fin[:, :, :dout], axis=1)                          # (TN, Dout)  (mean: 1/K folded)
    out = jnp.sum(fin[:, :, dout:], axis=-1)                         # (TN, K)
    packed_ref[...] = jnp.concatenate([hid, out], axis=-1)           # (TN, Dout+K)


# ---------------------------------------------------------------------------
# Parameter packing (fused weights for the kernel)
# ---------------------------------------------------------------------------
def _pack_layer_params(params, K, matmul_dtype):
    w1o, b1o, w2o, b2o, w1h, b1h, w2h, b2h = params
    F2, H = w1o.shape
    F = F2 // 2
    Dout = w2h.shape[1]
    # fused layer-1: columns [out_compute || hidden_compute]
    w1 = jnp.concatenate([w1o, w1h], axis=1)                 # (2F, 2H)
    w1_top = w1[:F].astype(matmul_dtype)                     # acts on gathered feats
    w1_bot = w1[F:].astype(matmul_dtype)                     # acts on self feats
    b1 = jnp.concatenate([b1o, b1h], axis=1)                 # (1, 2H) f32
    # fused block-diagonal layer-2; 1/K of the anchor mean folded in
    w2 = jnp.zeros((2 * H, Dout + 1), jnp.float32)
    w2 = w2.at[H:, :Dout].set(w2h / K)                       # hidden head
    w2 = w2.at[:H, Dout].set(w2o[:, 0])                      # out head
    w2 = w2.astype(matmul_dtype)
    b2 = jnp.concatenate([b2h / K, b2o], axis=1)             # (1, Dout+1) f32
    return w1_top, w1_bot, b1, w2, b2, F, H, Dout


def _pick_tile_n(n, cap=512):
    """Biggest node tile: the whole graph if small, else the largest
    multiple-of-8 divisor of n that is <= cap (keeps (8,128) rules happy and
    the per-step pipeline overhead amortized)."""
    if n <= cap:
        return n
    best = 0
    for t in range(8, cap + 1, 8):
        if n % t == 0:
            best = t
    return best if best > 0 else n


# ---------------------------------------------------------------------------
# One PositionGraphConv layer (wrapper: gather glue + pallas_call + dim-0 norm)
# ---------------------------------------------------------------------------
def position_graph_conv(feature, dist_max, dist_argmax, params,
                        matmul_dtype=jnp.float32):
    N, K = dist_argmax.shape
    F = feature.shape[1]
    w1_top, w1_bot, b1, w2, b2, Fp, H, Dout = _pack_layer_params(params, K, matmul_dtype)
    assert Fp == F

    # data-dependent gather stays as JAX glue; only the gathered half hits HBM,
    # the self half / (N,K,2F) concat never do.
    gathered = jnp.take(feature, dist_argmax.reshape(-1), axis=0).reshape(N, K, F)
    dmax3 = dist_max[..., None].astype(jnp.float32)                  # (N, K, 1)

    tile_n = _pick_tile_n(N)
    grid = (N // tile_n,)
    full2 = lambda i: (0, 0)

    packed = pl.pallas_call(
        _pgc_kernel,
        out_shape=jax.ShapeDtypeStruct((N, Dout + K), jnp.float32),
        grid_spec=pltpu.PrefetchScalarGridSpec(
            num_scalar_prefetch=0,
            grid=grid,
            in_specs=[
                pl.BlockSpec((tile_n, K, F), lambda i: (i, 0, 0)),   # gathered feats
                pl.BlockSpec((tile_n, K, 1), lambda i: (i, 0, 0)),   # dist_max
                pl.BlockSpec((tile_n, F), lambda i: (i, 0)),         # self feats
                pl.BlockSpec((F, 2 * H), full2),                     # fused W1 (top)
                pl.BlockSpec((F, 2 * H), full2),                     # fused W1 (bottom)
                pl.BlockSpec((1, 2 * H), full2),                     # fused b1
                pl.BlockSpec((2 * H, Dout + 1), full2),              # fused block-diag W2
                pl.BlockSpec((1, Dout + 1), full2),                  # fused b2
            ],
            out_specs=pl.BlockSpec((tile_n, Dout + K), lambda i: (i, 0)),
        ),
        compiler_params=pltpu.CompilerParams(
            dimension_semantics=("parallel",),
            vmem_limit_bytes=32 * 1024 * 1024),
    )(gathered, dmax3, feature, w1_top, w1_bot, b1, w2, b2)

    hid, out = packed[:, :Dout], packed[:, Dout:]
    # normalize_embedding=True: (x - mean(x, dim=0)) / std(x, dim=0);
    # torch.std is unbiased (ddof=1). Tiny cross-node reduce -> JAX glue.
    out = (out - jnp.mean(out, axis=0)) / jnp.std(out, axis=0, ddof=1)
    hid = (hid - jnp.mean(hid, axis=0)) / jnp.std(hid, axis=0, ddof=1)
    return out, hid


# ---------------------------------------------------------------------------
# PGNN forward (num_layers >= 2 path of the PyTorch module)
# ---------------------------------------------------------------------------
def pgnn_forward(feature, dist, dist_max, dist_argmax, layer_params,
                 matmul_dtype=jnp.float32):
    # `dist` is unused by the reference forward (dist_only=False); kept for parity.
    del dist
    _, feat = position_graph_conv(feature, dist_max, dist_argmax, layer_params[0],
                                  matmul_dtype)
    for p in layer_params[1:-1]:
        _, feat = position_graph_conv(feat, dist_max, dist_argmax, p, matmul_dtype)
    pred, _ = position_graph_conv(feat, dist_max, dist_argmax, layer_params[-1],
                                  matmul_dtype)
    return pred


# ---------------------------------------------------------------------------
# Deterministic parameter init (xavier_uniform with ReLU gain, zero bias)
# ---------------------------------------------------------------------------
def _init_mlp(key, in_dim, hid_dim, out_dim):
    k1, k2 = jax.random.split(key)
    gain = math.sqrt(2.0)  # nn.init.calculate_gain('relu')
    bnd1 = gain * math.sqrt(6.0 / (in_dim + hid_dim))
    bnd2 = gain * math.sqrt(6.0 / (hid_dim + out_dim))
    w1 = jax.random.uniform(k1, (in_dim, hid_dim), jnp.float32, -bnd1, bnd1)
    w2 = jax.random.uniform(k2, (hid_dim, out_dim), jnp.float32, -bnd2, bnd2)
    return w1, jnp.zeros((1, hid_dim), jnp.float32), w2, jnp.zeros((1, out_dim), jnp.float32)


def init_position_graph_conv(key, in_dim, hid_dim, out_dim):
    ko, kh = jax.random.split(key)
    w1o, b1o, w2o, b2o = _init_mlp(ko, 2 * in_dim, hid_dim, 1)        # out_compute
    w1h, b1h, w2h, b2h = _init_mlp(kh, 2 * in_dim, hid_dim, out_dim)  # hidden_compute
    return (w1o, b1o, w2o, b2o, w1h, b1h, w2h, b2h)


# ---------------------------------------------------------------------------
# Pure-JAX reference (mirrors the PyTorch forward) for a correctness check
# ---------------------------------------------------------------------------
def _mlp_ref(x, w1, b1, w2, b2):
    return jnp.maximum(x @ w1 + b1, 0.0) @ w2 + b2


def _pgc_ref(feature, dist_max, dist_argmax, params):
    w1o, b1o, w2o, b2o, w1h, b1h, w2h, b2h = params
    N, K = dist_argmax.shape
    F = feature.shape[1]
    subset = feature[dist_argmax.reshape(-1)].reshape(N, K, F)
    self_f = jnp.broadcast_to(feature[:, None, :], (N, K, F))
    msg = jnp.concatenate([subset, self_f], axis=-1) * dist_max[..., None]
    out = _mlp_ref(msg, w1o, b1o, w2o, b2o)[..., 0]
    out = (out - jnp.mean(out, axis=0)) / jnp.std(out, axis=0, ddof=1)
    hid = jnp.mean(_mlp_ref(msg, w1h, b1h, w2h, b2h), axis=1)
    hid = (hid - jnp.mean(hid, axis=0)) / jnp.std(hid, axis=0, ddof=1)
    return out, hid


if __name__ == "__main__":
    key = jax.random.PRNGKey(0)
    N, K = 16, 4                      # nodes, anchor-sets
    input_dim, hidden_dim, output_dim = 16, 32, 8
    num_layers = 2

    kf, kd, km, ka, kp0, kp1 = jax.random.split(key, 6)
    feature = jax.random.normal(kf, (N, input_dim), jnp.float32)
    dist = jax.random.uniform(kd, (N, N), jnp.float32)          # unused by forward
    dist_max = jax.random.uniform(km, (N, K), jnp.float32)
    dist_argmax = jax.random.randint(ka, (N, K), 0, N, jnp.int32)

    layer_params = [
        init_position_graph_conv(kp0, input_dim, hidden_dim, hidden_dim),   # conv_first
        init_position_graph_conv(kp1, hidden_dim, hidden_dim, output_dim),  # conv_last
    ]

    # f32 MXU path (exactly matches the PyTorch semantics); pass
    # matmul_dtype=jnp.bfloat16 for the faster v6e/v7x MXU path.
    pred = jax.jit(pgnn_forward)(feature, dist, dist_max, dist_argmax, layer_params)
    pred = jax.block_until_ready(pred)

    # sanity-check against the pure-JAX reference of the same forward pass
    _, feat_ref = _pgc_ref(feature, dist_max, dist_argmax, layer_params[0])
    pred_ref, _ = _pgc_ref(feat_ref, dist_max, dist_argmax, layer_params[1])

    assert pred.shape == (N, K), pred.shape
    assert bool(jnp.all(jnp.isfinite(pred)))
    assert bool(jnp.allclose(pred, pred_ref, rtol=2e-2, atol=2e-2))
    print("KERNEL_OK")
</pallas_src>

<mosaic_0001>
module attributes {stable_mosaic.version = 11 : i64} {
  func.func @_pgc_kernel(%arg0: i32, %arg1: memref<16x4x16xf32, #tpu.memory_space<vmem>>, %arg2: memref<16x4x1xf32, #tpu.memory_space<vmem>>, %arg3: memref<16x16xf32, #tpu.memory_space<vmem>>, %arg4: memref<16x64xf32, #tpu.memory_space<vmem>>, %arg5: memref<16x64xf32, #tpu.memory_space<vmem>>, %arg6: memref<1x64xf32, #tpu.memory_space<vmem>>, %arg7: memref<64x33xf32, #tpu.memory_space<vmem>>, %arg8: memref<1x33xf32, #tpu.memory_space<vmem>>, %arg9: memref<16x36xf32, #tpu.memory_space<vmem>>) attributes {dimension_semantics = [#tpu.dimension_semantics<parallel>], iteration_bounds = array<i64: 1>, scalar_prefetch = 0 : i64, scratch_operands = 0 : i64, tpu.core_type = #tpu.core_type<tc>, window_params = [{transform_indices = @transform_0, window_bounds = array<i64: 16, 4, 16>}, {transform_indices = @transform_1, window_bounds = array<i64: 16, 4, 1>}, {transform_indices = @transform_2, window_bounds = array<i64: 16, 16>}, {pipeline_mode = #tpu.pipeline_mode<synchronous>, transform_indices = @transform_3, window_bounds = array<i64: 16, 64>}, {pipeline_mode = #tpu.pipeline_mode<synchronous>, transform_indices = @transform_4, window_bounds = array<i64: 16, 64>}, {pipeline_mode = #tpu.pipeline_mode<synchronous>, transform_indices = @transform_5, window_bounds = array<i64: 1, 64>}, {pipeline_mode = #tpu.pipeline_mode<synchronous>, transform_indices = @transform_6, window_bounds = array<i64: 64, 33>}, {pipeline_mode = #tpu.pipeline_mode<synchronous>, transform_indices = @transform_7, window_bounds = array<i64: 1, 33>}, {transform_indices = @transform_8, window_bounds = array<i64: 16, 36>}]} {
    %c0 = arith.constant 0 : index
    %c0_0 = arith.constant 0 : index
    %c0_1 = arith.constant 0 : index
    %0 = vector.load %arg2[%c0, %c0_0, %c0_1] : memref<16x4x1xf32, #tpu.memory_space<vmem>>, vector<16x4x1xf32>
    %c0_2 = arith.constant 0 : index
    %c0_3 = arith.constant 0 : index
    %c0_4 = arith.constant 0 : index
    %1 = vector.load %arg1[%c0_2, %c0_3, %c0_4] : memref<16x4x16xf32, #tpu.memory_space<vmem>>, vector<16x4x16xf32>
    %2 = vector.broadcast %0 : vector<16x4x1xf32> to vector<16x4x16xf32>
    %3 = arith.mulf %1, %2 : vector<16x4x16xf32>
    %c0_5 = arith.constant 0 : index
    %c0_6 = arith.constant 0 : index
    %4 = vector.load %arg4[%c0_5, %c0_6] : memref<16x64xf32, #tpu.memory_space<vmem>>, vector<16x64xf32>
    "tpu.trace_start"() <{level = 10 : i32, message = "nkf,fh->nkh"}> : () -> ()
    %cst = arith.constant dense<0.000000e+00> : vector<16x4x64xf32>
    %5 = tpu.matmul %3, %4, %cst {dimension_numbers = #tpu.dot_dimension_numbers<[2], [0], [0, 1], [1], [0, 0, 0, 1, 1, 1], [], []>} : vector<16x4x16xf32>, vector<16x64xf32>, vector<16x4x64xf32> -> vector<16x4x64xf32>
    "tpu.trace_stop"() : () -> ()
    %c0_7 = arith.constant 0 : index
    %c0_8 = arith.constant 0 : index
    %6 = vector.load %arg3[%c0_7, %c0_8] : memref<16x16xf32, #tpu.memory_space<vmem>>, vector<16x16xf32>
    %c0_9 = arith.constant 0 : index
    %c0_10 = arith.constant 0 : index
    %7 = vector.load %arg5[%c0_9, %c0_10] : memref<16x64xf32, #tpu.memory_space<vmem>>, vector<16x64xf32>
    %cst_11 = arith.constant dense<0.000000e+00> : vector<16x64xf32>
    %8 = tpu.matmul %6, %7, %cst_11 {dimension_numbers = #tpu.dot_dimension_numbers<[1], [0], [0], [1], [0, 0, 1, 1], [], []>} : vector<16x16xf32>, vector<16x64xf32>, vector<16x64xf32> -> vector<16x64xf32>
    %9 = vector.shape_cast %8 : vector<16x64xf32> to vector<16x1x64xf32>
    %10 = vector.broadcast %0 : vector<16x4x1xf32> to vector<16x4x64xf32>
    %11 = vector.broadcast %9 : vector<16x1x64xf32> to vector<16x4x64xf32>
    %12 = arith.mulf %10, %11 : vector<16x4x64xf32>
    %13 = arith.addf %5, %12 : vector<16x4x64xf32>
    %c0_12 = arith.constant 0 : index
    %c0_13 = arith.constant 0 : index
    %14 = vector.load %arg6[%c0_12, %c0_13] : memref<1x64xf32, #tpu.memory_space<vmem>>, vector<1x64xf32>
    %15 = vector.shape_cast %14 : vector<1x64xf32> to vector<1x1x64xf32>
    %16 = vector.broadcast %15 : vector<1x1x64xf32> to vector<16x4x64xf32>
    %17 = arith.addf %13, %16 : vector<16x4x64xf32>
    %cst_14 = arith.constant 0.000000e+00 : f32
    %18 = vector.broadcast %cst_14 : f32 to vector<16x4x64xf32>
    %19 = arith.maximumf %17, %18 : vector<16x4x64xf32>
    %c0_15 = arith.constant 0 : index
    %c0_16 = arith.constant 0 : index
    %20 = vector.load %arg7[%c0_15, %c0_16] : memref<64x33xf32, #tpu.memory_space<vmem>>, vector<64x33xf32>
    "tpu.trace_start"() <{level = 10 : i32, message = "nkh,hd->nkd"}> : () -> ()
    %cst_17 = arith.constant dense<0.000000e+00> : vector<16x4x33xf32>
    %21 = tpu.matmul %19, %20, %cst_17 {dimension_numbers = #tpu.dot_dimension_numbers<[2], [0], [0, 1], [1], [0, 0, 0, 1, 1, 1], [], []>} : vector<16x4x64xf32>, vector<64x33xf32>, vector<16x4x33xf32> -> vector<16x4x33xf32>
    "tpu.trace_stop"() : () -> ()
    %c0_18 = arith.constant 0 : index
    %c0_19 = arith.constant 0 : index
    %22 = vector.load %arg8[%c0_18, %c0_19] : memref<1x33xf32, #tpu.memory_space<vmem>>, vector<1x33xf32>
    %23 = vector.shape_cast %22 : vector<1x33xf32> to vector<1x1x33xf32>
    %24 = vector.broadcast %23 : vector<1x1x33xf32> to vector<16x4x33xf32>
    %25 = arith.addf %21, %24 : vector<16x4x33xf32>
    %26 = vector.extract_strided_slice %25 {offsets = [0, 0, 0], sizes = [16, 4, 32], strides = [1, 1, 1]} : vector<16x4x33xf32> to vector<16x4x32xf32>
    %cst_20 = arith.constant dense<0.000000e+00> : vector<16x32xf32>
    %27 = vector.multi_reduction <add>, %26, %cst_20 [1] : vector<16x4x32xf32> to vector<16x32xf32>
    %28 = vector.extract_strided_slice %25 {offsets = [0, 0, 32], sizes = [16, 4, 1], strides = [1, 1, 1]} : vector<16x4x33xf32> to vector<16x4x1xf32>
    %cst_21 = arith.constant dense<0.000000e+00> : vector<16x4xf32>
    %29 = vector.multi_reduction <add>, %28, %cst_21 [2] : vector<16x4x1xf32> to vector<16x4xf32>
    %30 = tpu.concatenate %27, %29 in 1 : vector<16x32xf32>, vector<16x4xf32> -> vector<16x36xf32>
    %c0_22 = arith.constant 0 : index
    %c0_23 = arith.constant 0 : index
    %31 = vector.load %arg9[%c0_22, %c0_23] : memref<16x36xf32, #tpu.memory_space<vmem>>, vector<16x36xf32>
    tpu.vector_store %arg9[%c0_22, %c0_23], %30 {strides = array<i32>} : memref<16x36xf32, #tpu.memory_space<vmem>>, vector<16x36xf32>,
    return
  }
  func.func @transform_0(%arg0: i32) -> (i32, i32, i32) {
    %c0_i32 = arith.constant 0 : i32
    %c0_i32_0 = arith.constant 0 : i32
    %c0_i32_1 = arith.constant 0 : i32
    return %arg0, %c0_i32, %c0_i32_0 : i32, i32, i32
  }
  func.func @transform_1(%arg0: i32) -> (i32, i32, i32) {
    %c0_i32 = arith.constant 0 : i32
    %c0_i32_0 = arith.constant 0 : i32
    %c0_i32_1 = arith.constant 0 : i32
    return %arg0, %c0_i32, %c0_i32_0 : i32, i32, i32
  }
  func.func @transform_2(%arg0: i32) -> (i32, i32) {
    %c0_i32 = arith.constant 0 : i32
    %c0_i32_0 = arith.constant 0 : i32
    return %arg0, %c0_i32 : i32, i32
  }
  func.func @transform_3(%arg0: i32) -> (i32, i32) {
    %c0_i32 = arith.constant 0 : i32
    %c0_i32_0 = arith.constant 0 : i32
    %c0_i32_1 = arith.constant 0 : i32
    return %c0_i32, %c0_i32_0 : i32, i32
  }
  func.func @transform_4(%arg0: i32) -> (i32, i32) {
    %c0_i32 = arith.constant 0 : i32
    %c0_i32_0 = arith.constant 0 : i32
    %c0_i32_1 = arith.constant 0 : i32
    return %c0_i32, %c0_i32_0 : i32, i32
  }
  func.func @transform_5(%arg0: i32) -> (i32, i32) {
    %c0_i32 = arith.constant 0 : i32
    %c0_i32_0 = arith.constant 0 : i32
    %c0_i32_1 = arith.constant 0 : i32
    return %c0_i32, %c0_i32_0 : i32, i32
  }
  func.func @transform_6(%arg0: i32) -> (i32, i32) {
    %c0_i32 = arith.constant 0 : i32
    %c0_i32_0 = arith.constant 0 : i32
    %c0_i32_1 = arith.constant 0 : i32
    return %c0_i32, %c0_i32_0 : i32, i32
  }
  func.func @transform_7(%arg0: i32) -> (i32, i32) {
    %c0_i32 = arith.constant 0 : i32
    %c0_i32_0 = arith.constant 0 : i32
    %c0_i32_1 = arith.constant 0 : i32
    return %c0_i32, %c0_i32_0 : i32, i32
  }
  func.func @transform_8(%arg0: i32) -> (i32, i32) {
    %c0_i32 = arith.constant 0 : i32
    %c0_i32_0 = arith.constant 0 : i32
    return %arg0, %c0_i32 : i32, i32
  }
}

module attributes {stable_mosaic.version = 11 : i64} {
  func.func @_pgc_kernel(%arg0: i32, %arg1: memref<16x4x32xf32, #tpu.memory_space<vmem>>, %arg2: memref<16x4x1xf32, #tpu.memory_space<vmem>>, %arg3: memref<16x32xf32, #tpu.memory_space<vmem>>, %arg4: memref<32x64xf32, #tpu.memory_space<vmem>>, %arg5: memref<32x64xf32, #tpu.memory_space<vmem>>, %arg6: memref<1x64xf32, #tpu.memory_space<vmem>>, %arg7: memref<64x9xf32, #tpu.memory_space<vmem>>, %arg8: memref<1x9xf32, #tpu.memory_space<vmem>>, %arg9: memref<16x12xf32, #tpu.memory_space<vmem>>) attributes {dimension_semantics = [#tpu.dimension_semantics<parallel>], iteration_bounds = array<i64: 1>, scalar_prefetch = 0 : i64, scratch_operands = 0 : i64, tpu.core_type = #tpu.core_type<tc>, window_params = [{transform_indices = @transform_0, window_bounds = array<i64: 16, 4, 32>}, {transform_indices = @transform_1, window_bounds = array<i64: 16, 4, 1>}, {transform_indices = @transform_2, window_bounds = array<i64: 16, 32>}, {pipeline_mode = #tpu.pipeline_mode<synchronous>, transform_indices = @transform_3, window_bounds = array<i64: 32, 64>}, {pipeline_mode = #tpu.pipeline_mode<synchronous>, transform_indices = @transform_4, window_bounds = array<i64: 32, 64>}, {pipeline_mode = #tpu.pipeline_mode<synchronous>, transform_indices = @transform_5, window_bounds = array<i64: 1, 64>}, {pipeline_mode = #tpu.pipeline_mode<synchronous>, transform_indices = @transform_6, window_bounds = array<i64: 64, 9>}, {pipeline_mode = #tpu.pipeline_mode<synchronous>, transform_indices = @transform_7, window_bounds = array<i64: 1, 9>}, {transform_indices = @transform_8, window_bounds = array<i64: 16, 12>}]} {
    %c0 = arith.constant 0 : index
    %c0_0 = arith.constant 0 : index
    %c0_1 = arith.constant 0 : index
    %0 = vector.load %arg2[%c0, %c0_0, %c0_1] : memref<16x4x1xf32, #tpu.memory_space<vmem>>, vector<16x4x1xf32>
    %c0_2 = arith.constant 0 : index
    %c0_3 = arith.constant 0 : index
    %c0_4 = arith.constant 0 : index
    %1 = vector.load %arg1[%c0_2, %c0_3, %c0_4] : memref<16x4x32xf32, #tpu.memory_space<vmem>>, vector<16x4x32xf32>
    %2 = vector.broadcast %0 : vector<16x4x1xf32> to vector<16x4x32xf32>
    %3 = arith.mulf %1, %2 : vector<16x4x32xf32>
    %c0_5 = arith.constant 0 : index
    %c0_6 = arith.constant 0 : index
    %4 = vector.load %arg4[%c0_5, %c0_6] : memref<32x64xf32, #tpu.memory_space<vmem>>, vector<32x64xf32>
    "tpu.trace_start"() <{level = 10 : i32, message = "nkf,fh->nkh"}> : () -> ()
    %cst = arith.constant dense<0.000000e+00> : vector<16x4x64xf32>
    %5 = tpu.matmul %3, %4, %cst {dimension_numbers = #tpu.dot_dimension_numbers<[2], [0], [0, 1], [1], [0, 0, 0, 1, 1, 1], [], []>} : vector<16x4x32xf32>, vector<32x64xf32>, vector<16x4x64xf32> -> vector<16x4x64xf32>
    "tpu.trace_stop"() : () -> ()
    %c0_7 = arith.constant 0 : index
    %c0_8 = arith.constant 0 : index
    %6 = vector.load %arg3[%c0_7, %c0_8] : memref<16x32xf32, #tpu.memory_space<vmem>>, vector<16x32xf32>
    %c0_9 = arith.constant 0 : index
    %c0_10 = arith.constant 0 : index
    %7 = vector.load %arg5[%c0_9, %c0_10] : memref<32x64xf32, #tpu.memory_space<vmem>>, vector<32x64xf32>
    %cst_11 = arith.constant dense<0.000000e+00> : vector<16x64xf32>
    %8 = tpu.matmul %6, %7, %cst_11 {dimension_numbers = #tpu.dot_dimension_numbers<[1], [0], [0], [1], [0, 0, 1, 1], [], []>} : vector<16x32xf32>, vector<32x64xf32>, vector<16x64xf32> -> vector<16x64xf32>
    %9 = vector.shape_cast %8 : vector<16x64xf32> to vector<16x1x64xf32>
    %10 = vector.broadcast %0 : vector<16x4x1xf32> to vector<16x4x64xf32>
    %11 = vector.broadcast %9 : vector<16x1x64xf32> to vector<16x4x64xf32>
    %12 = arith.mulf %10, %11 : vector<16x4x64xf32>
    %13 = arith.addf %5, %12 : vector<16x4x64xf32>
    %c0_12 = arith.constant 0 : index
    %c0_13 = arith.constant 0 : index
    %14 = vector.load %arg6[%c0_12, %c0_13] : memref<1x64xf32, #tpu.memory_space<vmem>>, vector<1x64xf32>
    %15 = vector.shape_cast %14 : vector<1x64xf32> to vector<1x1x64xf32>
    %16 = vector.broadcast %15 : vector<1x1x64xf32> to vector<16x4x64xf32>
    %17 = arith.addf %13, %16 : vector<16x4x64xf32>
    %cst_14 = arith.constant 0.000000e+00 : f32
    %18 = vector.broadcast %cst_14 : f32 to vector<16x4x64xf32>
    %19 = arith.maximumf %17, %18 : vector<16x4x64xf32>
    %c0_15 = arith.constant 0 : index
    %c0_16 = arith.constant 0 : index
    %20 = vector.load %arg7[%c0_15, %c0_16] : memref<64x9xf32, #tpu.memory_space<vmem>>, vector<64x9xf32>
    "tpu.trace_start"() <{level = 10 : i32, message = "nkh,hd->nkd"}> : () -> ()
    %cst_17 = arith.constant dense<0.000000e+00> : vector<16x4x9xf32>
    %21 = tpu.matmul %19, %20, %cst_17 {dimension_numbers = #tpu.dot_dimension_numbers<[2], [0], [0, 1], [1], [0, 0, 0, 1, 1, 1], [], []>} : vector<16x4x64xf32>, vector<64x9xf32>, vector<16x4x9xf32> -> vector<16x4x9xf32>
    "tpu.trace_stop"() : () -> ()
    %c0_18 = arith.constant 0 : index
    %c0_19 = arith.constant 0 : index
    %22 = vector.load %arg8[%c0_18, %c0_19] : memref<1x9xf32, #tpu.memory_space<vmem>>, vector<1x9xf32>
    %23 = vector.shape_cast %22 : vector<1x9xf32> to vector<1x1x9xf32>
    %24 = vector.broadcast %23 : vector<1x1x9xf32> to vector<16x4x9xf32>
    %25 = arith.addf %21, %24 : vector<16x4x9xf32>
    %26 = vector.extract_strided_slice %25 {offsets = [0, 0, 0], sizes = [16, 4, 8], strides = [1, 1, 1]} : vector<16x4x9xf32> to vector<16x4x8xf32>
    %cst_20 = arith.constant dense<0.000000e+00> : vector<16x8xf32>
    %27 = vector.multi_reduction <add>, %26, %cst_20 [1] : vector<16x4x8xf32> to vector<16x8xf32>
    %28 = vector.extract_strided_slice %25 {offsets = [0, 0, 8], sizes = [16, 4, 1], strides = [1, 1, 1]} : vector<16x4x9xf32> to vector<16x4x1xf32>
    %cst_21 = arith.constant dense<0.000000e+00> : vector<16x4xf32>
    %29 = vector.multi_reduction <add>, %28, %cst_21 [2] : vector<16x4x1xf32> to vector<16x4xf32>
    %30 = tpu.concatenate %27, %29 in 1 : vector<16x8xf32>, vector<16x4xf32> -> vector<16x12xf32>
    %c0_22 = arith.constant 0 : index
    %c0_23 = arith.constant 0 : index
    %31 = vector.load %arg9[%c0_22, %c0_23] : memref<16x12xf32, #tpu.memory_space<vmem>>, vector<16x12xf32>
    tpu.vector_store %arg9[%c0_22, %c0_23], %30 {strides = array<i32>} : memref<16x12xf32, #tpu.memory_space<vmem>>, vector<16x12xf32>,
    return
  }
  func.func @transform_0(%arg0: i32) -> (i32, i32, i32) {
    %c0_i32 = arith.constant 0 : i32
    %c0_i32_0 = arith.constant 0 : i32
    %c0_i32_1 = arith.constant 0 : i32
    return %arg0, %c0_i32, %c0_i32_0 : i32, i32, i32
  }
  func.func @transform_1(%arg0: i32) -> (i32, i32, i32) {
    %c0_i32 = arith.constant 0 : i32
    %c0_i32_0 = arith.constant 0 : i32
    %c0_i32_1 = arith.constant 0 : i32
    return %arg0, %c0_i32, %c0_i32_0 : i32, i32, i32
  }
  func.func @transform_2(%arg0: i32) -> (i32, i32) {
    %c0_i32 = arith.constant 0 : i32
    %c0_i32_0 = arith.constant 0 : i32
    return %arg0, %c0_i32 : i32, i32
  }
  func.func @transform_3(%arg0: i32) -> (i32, i32) {
    %c0_i32 = arith.constant 0 : i32
    %c0_i32_0 = arith.constant 0 : i32
    %c0_i32_1 = arith.constant 0 : i32
    return %c0_i32, %c0_i32_0 : i32, i32
  }
  func.func @transform_4(%arg0: i32) -> (i32, i32) {
    %c0_i32 = arith.constant 0 : i32
    %c0_i32_0 = arith.constant 0 : i32
    %c0_i32_1 = arith.constant 0 : i32
    return %c0_i32, %c0_i32_0 : i32, i32
  }
  func.func @transform_5(%arg0: i32) -> (i32, i32) {
    %c0_i32 = arith.constant 0 : i32
    %c0_i32_0 = arith.constant 0 : i32
    %c0_i32_1 = arith.constant 0 : i32
    return %c0_i32, %c0_i32_0 : i32, i32
  }
  func.func @transform_6(%arg0: i32) -> (i32, i32) {
    %c0_i32 = arith.constant 0 : i32
    %c0_i32_0 = arith.constant 0 : i32
    %c0_i32_1 = arith.constant 0 : i32
    return %c0_i32, %c0_i32_0 : i32, i32
  }
  func.func @transform_7(%arg0: i32) -> (i32, i32) {
    %c0_i32 = arith.constant 0 : i32
    %c0_i32_0 = arith.constant 0 : i32
    %c0_i32_1 = arith.constant 0 : i32
    return %c0_i32, %c0_i32_0 : i32, i32
  }
  func.func @transform_8(%arg0: i32) -> (i32, i32) {
    %c0_i32 = arith.constant 0 : i32
    %c0_i32_0 = arith.constant 0 : i32
    return %arg0, %c0_i32 : i32, i32
  }
}

</mosaic_0001>

<llo_original>
// kernel: pgnn_forward.2
$region0: #{pgnn_forward.2}
  #allocation0 [shape = 'u32[]', space=smem, size = 0x4, offset = 0x4, fixed_abs, tag = 'smem constant byte address 0x4 - core index']
  #allocation1 [shape = 'u32[144,128]{1,0:T(1,128)}', space=vmem, size = 0x12000, scoped, tag = 'internal scratch']
  %s0 = inlined_call_operand.vmem [shape: f32[16,4,16], index: 0, kind: input, shape index: {}]
  %s1 = inlined_call_operand.vmem [shape: f32[16,4,1], index: 1, kind: input, shape index: {}]
  %s2 = inlined_call_operand.vmem [shape: f32[16,16], index: 2, kind: input, shape index: {}]
  %s3 = inlined_call_operand.vmem [shape: f32[16,64], index: 3, kind: input, shape index: {}]
  %s4 = inlined_call_operand.vmem [shape: f32[16,64], index: 4, kind: input, shape index: {}]
  %s5 = inlined_call_operand.vmem [shape: f32[1,64], index: 5, kind: input, shape index: {}]
  %s6 = inlined_call_operand.vmem [shape: f32[64,33], index: 6, kind: input, shape index: {}]
  %s7 = inlined_call_operand.vmem [shape: f32[1,33], index: 7, kind: input, shape index: {}]
  %s8 = inlined_call_operand.vmem [shape: f32[16,36], index: 8, kind: output, shape index: {}]
  %s9 = sld [smem:[#allocation0]]
  $region42: #{pgnn_forward.2} parent=0
    _
  %s11 = ssub.s32 1, %s9
  %s12 = scalar_select 0, %s11, %s9
  // Predicated region
  $region2: #{pgnn_forward.2} parent=0 // pred_check
    _
  $region3: #{pgnn_forward.2} parent=0 // pred_check_branch
    %14 = sbr.rel (0) target = $region5
  $region4: #{pgnn_forward.2} parent=0 // pred_region
    _
  $region5: #{pgnn_forward.2} parent=0 // pred_fallthru
    _
  // Predicated region
  $region6: #{pgnn_forward.2} parent=0 // pred_check
    _
  $region7: #{pgnn_forward.2} parent=0 // pred_check_branch
    %16 = sbr.rel (0) target = $region9
  $region8: #{pgnn_forward.2} parent=0 // pred_region
    _
  $region9: #{pgnn_forward.2} parent=0 // pred_fallthru
    _
  // Predicated region
  $region10: #{pgnn_forward.2} parent=0 // pred_check
    _
  $region11: #{pgnn_forward.2} parent=0 // pred_check_branch
    %18 = sbr.rel (0) target = $region13
  $region12: #{pgnn_forward.2} parent=0 // pred_region
    _
  $region13: #{pgnn_forward.2} parent=0 // pred_fallthru
    _
  // Predicated region
  $region14: #{pgnn_forward.2} parent=0 // pred_check
    _
  $region15: #{pgnn_forward.2} parent=0 // pred_check_branch
    %20 = sbr.rel (0) target = $region17
  $region16: #{pgnn_forward.2} parent=0 // pred_region
    _
  $region17: #{pgnn_forward.2} parent=0 // pred_fallthru
    _
  // Predicated region
  $region18: #{pgnn_forward.2} parent=0 // pred_check
    _
  $region19: #{pgnn_forward.2} parent=0 // pred_check_branch
    %22 = sbr.rel (0) target = $region21
  $region20: #{pgnn_forward.2} parent=0 // pred_region
    _
  $region21: #{pgnn_forward.2} parent=0 // pred_fallthru
    _
  // Predicated region
  $region22: #{pgnn_forward.2} parent=0 // pred_check
    _
  $region23: #{pgnn_forward.2} parent=0 // pred_check_branch
    %24 = sbr.rel (0) target = $region25
  $region24: #{pgnn_forward.2} parent=0 // pred_region
    _
  $region25: #{pgnn_forward.2} parent=0 // pred_fallthru
    _
  // Predicated region
  $region26: #{pgnn_forward.2} parent=0 // pred_check
    _
  $region27: #{pgnn_forward.2} parent=0 // pred_check_branch
    %26 = sbr.rel (0) target = $region29
  $region28: #{pgnn_forward.2} parent=0 // pred_region
    _
  $region29: #{pgnn_forward.2} parent=0 // pred_fallthru
    _
  // Predicated region
  $region30: #{pgnn_forward.2} parent=0 // pred_check
    _
  $region31: #{pgnn_forward.2} parent=0 // pred_check_branch
    %28 = sbr.rel (0) target = $region33
  $region32: #{pgnn_forward.2} parent=0 // pred_region
    _
  $region33: #{pgnn_forward.2} parent=0 // pred_fallthru
    _
  %v29 = vld [vmem:[%s1] sm:$0xf]
  %v30 = vld [vmem:[%s1 + $0x4] sm:$0xf]
  %v31 = vld [vmem:[%s1 + $0x8] sm:$0xf]
  %v32 = vld [vmem:[%s1 + $0xc] sm:$0xf]
  %v33 = vld [vmem:[%s1 + $0x10] sm:$0xf]
  %v34 = vld [vmem:[%s1 + $0x14] sm:$0xf]
  %v35 = vld [vmem:[%s1 + $0x18] sm:$0xf]
  %v36 = vld [vmem:[%s1 + $0x1c] sm:$0xf]
  %v37 = vld [vmem:[%s1 + $0x20] sm:$0xf]
  %v38 = vld [vmem:[%s1 + $0x24] sm:$0xf]
  %v39 = vld [vmem:[%s1 + $0x28] sm:$0xf]
  %v40 = vld [vmem:[%s1 + $0x2c] sm:$0xf]
  %v41 = vld [vmem:[%s1 + $0x30] sm:$0xf]
  %v42 = vld [vmem:[%s1 + $0x34] sm:$0xf]
  %v43 = vld [vmem:[%s1 + $0x38] sm:$0xf]
  %v44 = vld [vmem:[%s1 + $0x3c] sm:$0xf]
  %v45 = vld [vmem:[%s0] sm:$0xf]
  %v46 = vld [vmem:[%s0 + $0x4] sm:$0xf]
  %v47 = vld [vmem:[%s0 + $0x8] sm:$0xf]
  %v48 = vld [vmem:[%s0 + $0xc] sm:$0xf]
  %v49 = vld [vmem:[%s0 + $0x10] sm:$0xf]
  %v50 = vld [vmem:[%s0 + $0x14] sm:$0xf]
  %v51 = vld [vmem:[%s0 + $0x18] sm:$0xf]
  %v52 = vld [vmem:[%s0 + $0x1c] sm:$0xf]
  %v53 = vld [vmem:[%s0 + $0x20] sm:$0xf]
  %v54 = vld [vmem:[%s0 + $0x24] sm:$0xf]
  %v55 = vld [vmem:[%s0 + $0x28] sm:$0xf]
  %v56 = vld [vmem:[%s0 + $0x2c] sm:$0xf]
  %v57 = vld [vmem:[%s0 + $0x30] sm:$0xf]
  %v58 = vld [vmem:[%s0 + $0x34] sm:$0xf]
  %v59 = vld [vmem:[%s0 + $0x38] sm:$0xf]
  %v60 = vld [vmem:[%s0 + $0x3c] sm:$0xf]
  %62 = vset.pattern.permute.xlu0 0
  %63 = vperm.xlu0 %62, %v29
  %v64 = vpop.permute.xlu0 %63
  %67 = vset.pattern.permute.xlu0 0
  %68 = vperm.xlu0 %67, %v30
  %v69 = vpop.permute.xlu0 %68
  %72 = vset.pattern.permute.xlu0 0
  %73 = vperm.xlu0 %72, %v31
  %v74 = vpop.permute.xlu0 %73
  %77 = vset.pattern.permute.xlu0 0
  %78 = vperm.xlu0 %77, %v32
  %v79 = vpop.permute.xlu0 %78
  %82 = vset.pattern.permute.xlu0 0
  %83 = vperm.xlu0 %82, %v33
  %v84 = vpop.permute.xlu0 %83
  %87 = vset.pattern.permute.xlu0 0
  %88 = vperm.xlu0 %87, %v34
  %v89 = vpop.permute.xlu0 %88
  %92 = vset.pattern.permute.xlu0 0
  %93 = vperm.xlu0 %92, %v35
  %v94 = vpop.permute.xlu0 %93
  %97 = vset.pattern.permute.xlu0 0
  %98 = vperm.xlu0 %97, %v36
  %v99 = vpop.permute.xlu0 %98
  %102 = vset.pattern.permute.xlu0 0
  %103 = vperm.xlu0 %102, %v37
  %v104 = vpop.permute.xlu0 %103
  %107 = vset.pattern.permute.xlu0 0
  %108 = vperm.xlu0 %107, %v38
  %v109 = vpop.permute.xlu0 %108
  %112 = vset.pattern.permute.xlu0 0
  %113 = vperm.xlu0 %112, %v39
  %v114 = vpop.permute.xlu0 %113
  %117 = vset.pattern.permute.xlu0 0
  %118 = vperm.xlu0 %117, %v40
  %v119 = vpop.permute.xlu0 %118
  %122 = vset.pattern.permute.xlu0 0
  %123 = vperm.xlu0 %122, %v41
  %v124 = vpop.permute.xlu0 %123
  %127 = vset.pattern.permute.xlu0 0
  %128 = vperm.xlu0 %127, %v42
  %v129 = vpop.permute.xlu0 %128
  %132 = vset.pattern.permute.xlu0 0
  %133 = vperm.xlu0 %132, %v43
  %v134 = vpop.permute.xlu0 %133
  %137 = vset.pattern.permute.xlu0 0
  %138 = vperm.xlu0 %137, %v44
  %v139 = vpop.permute.xlu0 %138
  %v141 = vmul.f32 %v45, %v64
  %v142 = vmul.f32 %v46, %v69
  %v143 = vmul.f32 %v47, %v74
  %v144 = vmul.f32 %v48, %v79
  %v145 = vmul.f32 %v49, %v84
  %v146 = vmul.f32 %v50, %v89
  %v147 = vmul.f32 %v51, %v94
  %v148 = vmul.f32 %v52, %v99
  %v149 = vmul.f32 %v53, %v104
  %v150 = vmul.f32 %v54, %v109
  %v151 = vmul.f32 %v55, %v114
  %v152 = vmul.f32 %v56, %v119
  %v153 = vmul.f32 %v57, %v124
  %v154 = vmul.f32 %v58, %v129
  %v155 = vmul.f32 %v59, %v134
  %v156 = vmul.f32 %v60, %v139
  %v157 = vld [vmem:[%s3] sm:$0xff]
  %v158 = vld [vmem:[%s3 + $0x8] sm:$0xff]
  %v159 = vld [vmem:[%s2] sm:$0xff]
  %v160 = vld [vmem:[%s2 + $0x8] sm:$0xff]
  %v161 = vld [vmem:[%s4] sm:$0xff]
  %v162 = vld [vmem:[%s4 + $0x8] sm:$0xff]
  %vm163 = vcmask 130048
  %v165 = vsel %vm163, %v159, 0
  %v168 = vsel %vm163, %v160, 0
  %170 = vmatprep.subr.mxu0 0.0
  %171 = vmatpush1.msra.mxu0 0.0
  %172 = vmatprep.subr.mxu0 0.0
  %173 = vmatpush1.msra.mxu0 0.0
  %174 = vmatprep.subr.mxu0 0.0
  %175 = vmatpush1.msra.mxu0 0.0
  %176 = vmatprep.subr.mxu0 0.0
  %177 = vmatpush1.msra.mxu0 0.0
  %178 = vmatprep.subr.mxu0 0.0
  %179 = vmatpush1.msra.mxu0 0.0
  %180 = vmatprep.subr.mxu0 0.0
  %181 = vmatpush1.msra.mxu0 0.0
  %182 = vmatprep.subr.mxu0 0.0
  %183 = vmatpush1.msra.mxu0 0.0
  %184 = vmatprep.subr.mxu0 0.0
  %185 = vmatpush1.msra.mxu0 0.0
  %186 = vmatprep.subr.mxu0 0.0
  %187 = vmatpush1.msra.mxu0 0.0
  %188 = vmatprep.subr.mxu0 0.0
  %189 = vmatpush1.msra.mxu0 0.0
  %190 = vmatprep.subr.mxu0 0.0
  %191 = vmatpush1.msra.mxu0 0.0
  %192 = vmatprep.subr.mxu0 0.0
  %193 = vmatpush1.msra.mxu0 0.0
  %194 = vmatprep.subr.mxu0 0.0
  %195 = vmatpush1.msra.mxu0 0.0
  %196 = vmatprep.subr.mxu0 0.0
  %197 = vmatpush1.msra.mxu0 0.0
  %198 = vmatprep.subr.mxu0 0.0
  %199 = vmatpush1.msra.mxu0 %v162
  %200 = vmatprep.subr.mxu0 0.0
  %201 = vmatpush1.msra.mxu0 %v161
  %202 = vmatprep.subr.mxu0 0.0
  %203 = vmatpush2.msra.mxu0 0.0
  %204 = vmatprep.subr.mxu0 0.0
  %205 = vmatpush2.msra.mxu0 0.0
  %206 = vmatprep.subr.mxu0 0.0
  %207 = vmatpush2.msra.mxu0 0.0
  %208 = vmatprep.subr.mxu0 0.0
  %209 = vmatpush2.msra.mxu0 0.0
  %210 = vmatprep.subr.mxu0 0.0
  %211 = vmatpush2.msra.mxu0 0.0
  %212 = vmatprep.subr.mxu0 0.0
  %213 = vmatpush2.msra.mxu0 0.0
  %214 = vmatprep.subr.mxu0 0.0
  %215 = vmatpush2.msra.mxu0 0.0
  %216 = vmatprep.subr.mxu0 0.0
  %217 = vmatpush2.msra.mxu0 0.0
  %218 = vmatprep.subr.mxu0 0.0
  %219 = vmatpush2.msra.mxu0 0.0
  %220 = vmatprep.subr.mxu0 0.0
  %221 = vmatpush2.msra.mxu0 0.0
  %222 = vmatprep.subr.mxu0 0.0
  %223 = vmatpush2.msra.mxu0 0.0
  %224 = vmatprep.subr.mxu0 0.0
  %225 = vmatpush2.msra.mxu0 0.0
  %226 = vmatprep.subr.mxu0 0.0
  %227 = vmatpush2.msra.mxu0 0.0
  %228 = vmatprep.subr.mxu0 0.0
  %229 = vmatpush2.msra.mxu0 0.0
  %230 = vmatprep.subr.mxu0 0.0
  %231 = vmatpush2.msra.mxu0 0.0
  %232 = vmatprep.subr.mxu0 0.0
  %233 = vmatpush2.msra.mxu0 0.0
  %234 = vmatprep.mubr.f32.mxu0 0.0
  %235 = vmatmul.mubr.f32.gmra.mxu0 %v165
  %v236 = vpop.f32.mrf.mxu0
  %v237 = vadd.f32 0.0, %v236
  %v238 = vpop.f32.mrf.mxu0
  %239 = vmatprep.mubr.f32.mxu0 0.0
  %240 = vmatmul.mubr.f32.gmra.mxu0 %v168
  %v241 = vpop.f32.mrf.mxu0
  %v242 = vadd.f32 0.0, %v241
  %v243 = vpop.f32.mrf.mxu0
  %244 = vdwg.mxu0
  %v247 = vcombine.high %v237, %v237
  %v249 = vunpack.c.l.s4 1966171168
  %v250 = vunpack.c.0.s8 %v249
  %v251 = vlaneseq
  %v252 = vshrl.u32 %v251, 7
  %v253 = vsub.s32 %v250, %v252
  %v254 = vrot.slane %v237, %v253
  %v256 = vunpack.c.l.s4 1966171168
  %v257 = vunpack.c.0.s8 %v256
  %v258 = vlaneseq
  %v259 = vshrl.u32 %v258, 7
  %v260 = vsub.s32 %v257, %v259
  %v261 = vrot.slane %v247, %v260
  %v262 = vcombine.high %v254, %v254
  %v263 = vcombine.high %v261, %v261
  %v265 = vunpack.c.l.s4 1966171168
  %v266 = vunpack.c.0.s8 %v265
  %v267 = vlaneseq
  %v268 = vshrl.u32 %v267, 7
  %v269 = vsub.s32 %v266, %v268
  %v270 = vrot.slane %v254, %v269
  %v272 = vunpack.c.l.s4 1966171168
  %v273 = vunpack.c.0.s8 %v272
  %v274 = vlaneseq
  %v275 = vshrl.u32 %v274, 7
  %v276 = vsub.s32 %v273, %v275
  %v277 = vrot.slane %v261, %v276
  %v279 = vunpack.c.l.s4 1966171168
  %v280 = vunpack.c.0.s8 %v279
  %v281 = vlaneseq
  %v282 = vshrl.u32 %v281, 7
  %v283 = vsub.s32 %v280, %v282
  %v284 = vrot.slane %v262, %v283
  %v286 = vunpack.c.l.s4 1966171168
  %v287 = vunpack.c.0.s8 %v286
  %v288 = vlaneseq
  %v289 = vshrl.u32 %v288, 7
  %v290 = vsub.s32 %v287, %v289
  %v291 = vrot.slane %v263, %v290
  %v292 = vcombine.high %v270, %v270
  %v293 = vcombine.high %v277, %v277
  %v294 = vcombine.high %v284, %v284
  %v295 = vcombine.high %v291, %v291
  %v296 = vcombine.high %v242, %v242
  %v298 = vunpack.c.l.s4 1966171168
  %v299 = vunpack.c.0.s8 %v298
  %v300 = vlaneseq
  %v301 = vshrl.u32 %v300, 7
  %v302 = vsub.s32 %v299, %v301
  %v303 = vrot.slane %v242, %v302
  %v305 = vunpack.c.l.s4 1966171168
  %v306 = vunpack.c.0.s8 %v305
  %v307 = vlaneseq
  %v308 = vshrl.u32 %v307, 7
  %v309 = vsub.s32 %v306, %v308
  %v310 = vrot.slane %v296, %v309
  %v311 = vcombine.high %v303, %v303
  %v312 = vcombine.high %v310, %v310
  %v314 = vunpack.c.l.s4 1966171168
  %v315 = vunpack.c.0.s8 %v314
  %v316 = vlaneseq
  %v317 = vshrl.u32 %v316, 7
  %v318 = vsub.s32 %v315, %v317
  %v319 = vrot.slane %v303, %v318
  %v321 = vunpack.c.l.s4 1966171168
  %v322 = vunpack.c.0.s8 %v321
  %v323 = vlaneseq
  %v324 = vshrl.u32 %v323, 7
  %v325 = vsub.s32 %v322, %v324
  %v326 = vrot.slane %v310, %v325
  %v328 = vunpack.c.l.s4 1966171168
  %v329 = vunpack.c.0.s8 %v328
  %v330 = vlaneseq
  %v331 = vshrl.u32 %v330, 7
  %v332 = vsub.s32 %v329, %v331
  %v333 = vrot.slane %v311, %v332
  %v335 = vunpack.c.l.s4 1966171168
  %v336 = vunpack.c.0.s8 %v335
  %v337 = vlaneseq
  %v338 = vshrl.u32 %v337, 7
  %v339 = vsub.s32 %v336, %v338
  %v340 = vrot.slane %v312, %v339
  %v341 = vcombine.high %v319, %v319
  %v342 = vcombine.high %v326, %v326
  %v343 = vcombine.high %v333, %v333
  %v344 = vcombine.high %v340, %v340
  %v345 = vlaneseq
  %v346 = vshrl.u32 %v345, 7
  %v347 = vsub.s32 0, %v346
  %v348 = vrot.slane %v270, %v347
  %v349 = vlaneseq
  %v350 = vshrl.u32 %v349, 7
  %v351 = vsub.s32 0, %v350
  %v352 = vrot.slane %v284, %v351
  %v353 = vlaneseq
  %v354 = vshrl.u32 %v353, 7
  %v355 = vsub.s32 0, %v354
  %v356 = vrot.slane %v292, %v355
  %v357 = vlaneseq
  %v358 = vshrl.u32 %v357, 7
  %v359 = vsub.s32 0, %v358
  %v360 = vrot.slane %v294, %v359
  %v361 = vlaneseq
  %v362 = vshrl.u32 %v361, 7
  %v363 = vsub.s32 0, %v362
  %v364 = vrot.slane %v277, %v363
  %v365 = vlaneseq
  %v366 = vshrl.u32 %v365, 7
  %v367 = vsub.s32 0, %v366
  %v368 = vrot.slane %v291, %v367
  %v369 = vlaneseq
  %v370 = vshrl.u32 %v369, 7
  %v371 = vsub.s32 0, %v370
  %v372 = vrot.slane %v293, %v371
  %v373 = vlaneseq
  %v374 = vshrl.u32 %v373, 7
  %v375 = vsub.s32 0, %v374
  %v376 = vrot.slane %v295, %v375
  %v377 = vlaneseq
  %v378 = vshrl.u32 %v377, 7
  %v379 = vsub.s32 0, %v378
  %v380 = vrot.slane %v319, %v379
  %v381 = vlaneseq
  %v382 = vshrl.u32 %v381, 7
  %v383 = vsub.s32 0, %v382
  %v384 = vrot.slane %v333, %v383
  %v385 = vlaneseq
  %v386 = vshrl.u32 %v385, 7
  %v387 = vsub.s32 0, %v386
  %v388 = vrot.slane %v341, %v387
  %v389 = vlaneseq
  %v390 = vshrl.u32 %v389, 7
  %v391 = vsub.s32 0, %v390
  %v392 = vrot.slane %v343, %v391
  %v393 = vlaneseq
  %v394 = vshrl.u32 %v393, 7
  %v395 = vsub.s32 0, %v394
  %v396 = vrot.slane %v326, %v395
  %v397 = vlaneseq
  %v398 = vshrl.u32 %v397, 7
  %v399 = vsub.s32 0, %v398
  %v400 = vrot.slane %v340, %v399
  %v401 = vlaneseq
  %v402 = vshrl.u32 %v401, 7
  %v403 = vsub.s32 0, %v402
  %v404 = vrot.slane %v342, %v403
  %v405 = vlaneseq
  %v406 = vshrl.u32 %v405, 7
  %v407 = vsub.s32 0, %v406
  %v408 = vrot.slane %v344, %v407
  %v425 = vmul.f32 %v64, %v348
  %v426 = vmul.f32 %v69, %v352
  %v427 = vmul.f32 %v74, %v356
  %v428 = vmul.f32 %v79, %v360
  %v429 = vmul.f32 %v84, %v364
  %v430 = vmul.f32 %v89, %v368
  %v431 = vmul.f32 %v94, %v372
  %v432 = vmul.f32 %v99, %v376
  %v433 = vmul.f32 %v104, %v380
  %v434 = vmul.f32 %v109, %v384
  %v435 = vmul.f32 %v114, %v388
  %v436 = vmul.f32 %v119, %v392
  %v437 = vmul.f32 %v124, %v396
  %v438 = vmul.f32 %v129, %v400
  %v439 = vmul.f32 %v134, %v404
  %v440 = vmul.f32 %v139, %v408
  %v457 = vcombine.low %v141, %v142
  %v458 = vcombine.low %v143, %v144
  %v459 = vcombine.low %v145, %v146
  %v460 = vcombine.low %v147, %v148
  %v461 = vcombine.low %v149, %v150
  %v462 = vcombine.low %v151, %v152
  %v463 = vcombine.low %v153, %v154
  %v464 = vcombine.low %v155, %v156
  %v481 = vcombine.low %v425, %v426
  %v482 = vcombine.low %v427, %v428
  %v483 = vcombine.low %v429, %v430
  %v484 = vcombine.low %v431, %v432
  %v485 = vcombine.low %v433, %v434
  %v486 = vcombine.low %v435, %v436
  %v487 = vcombine.low %v437, %v438
  %v488 = vcombine.low %v439, %v440
  %v497 = vsel %vm163, %v457, 0
  %v499 = vsel %vm163, %v458, 0
  %v501 = vsel %vm163, %v459, 0
  %v503 = vsel %vm163, %v460, 0
  %v505 = vsel %vm163, %v461, 0
  %v507 = vsel %vm163, %v462, 0
  %v509 = vsel %vm163, %v463, 0
  %v511 = vsel %vm163, %v464, 0
  %513 = vmatprep.subr.mxu0 0.0
  %514 = vmatpush1.msra.mxu0 0.0
  %515 = vmatprep.subr.mxu0 0.0
  %516 = vmatpush1.msra.mxu0 0.0
  %517 = vmatprep.subr.mxu0 0.0
  %518 = vmatpush1.msra.mxu0 0.0
  %519 = vmatprep.subr.mxu0 0.0
  %520 = vmatpush1.msra.mxu0 0.0
  %521 = vmatprep.subr.mxu0 0.0
  %522 = vmatpush1.msra.mxu0 0.0
  %523 = vmatprep.subr.mxu0 0.0
  %524 = vmatpush1.msra.mxu0 0.0
  %525 = vmatprep.subr.mxu0 0.0
  %526 = vmatpush1.msra.mxu0 0.0
  %527 = vmatprep.subr.mxu0 0.0
  %528 = vmatpush1.msra.mxu0 0.0
  %529 = vmatprep.subr.mxu0 0.0
  %530 = vmatpush1.msra.mxu0 0.0
  %531 = vmatprep.subr.mxu0 0.0
  %532 = vmatpush1.msra.mxu0 0.0
  %533 = vmatprep.subr.mxu0 0.0
  %534 = vmatpush1.msra.mxu0 0.0
  %535 = vmatprep.subr.mxu0 0.0
  %536 = vmatpush1.msra.mxu0 0.0
  %537 = vmatprep.subr.mxu0 0.0
  %538 = vmatpush1.msra.mxu0 0.0
  %539 = vmatprep.subr.mxu0 0.0
  %540 = vmatpush1.msra.mxu0 0.0
  %541 = vmatprep.subr.mxu0 0.0
  %542 = vmatpush1.msra.mxu0 %v158
  %543 = vmatprep.subr.mxu0 0.0
  %544 = vmatpush1.msra.mxu0 %v157
  %545 = vmatprep.subr.mxu0 0.0
  %546 = vmatpush2.msra.mxu0 0.0
  %547 = vmatprep.subr.mxu0 0.0
  %548 = vmatpush2.msra.mxu0 0.0
  %549 = vmatprep.subr.mxu0 0.0
  %550 = vmatpush2.msra.mxu0 0.0
  %551 = vmatprep.subr.mxu0 0.0
  %552 = vmatpush2.msra.mxu0 0.0
  %553 = vmatprep.subr.mxu0 0.0
  %554 = vmatpush2.msra.mxu0 0.0
  %555 = vmatprep.subr.mxu0 0.0
  %556 = vmatpush2.msra.mxu0 0.0
  %557 = vmatprep.subr.mxu0 0.0
  %558 = vmatpush2.msra.mxu0 0.0
  %559 = vmatprep.subr.mxu0 0.0
  %560 = vmatpush2.msra.mxu0 0.0
  %561 = vmatprep.subr.mxu0 0.0
  %562 = vmatpush2.msra.mxu0 0.0
  %563 = vmatprep.subr.mxu0 0.0
  %564 = vmatpush2.msra.mxu0 0.0
  %565 = vmatprep.subr.mxu0 0.0
  %566 = vmatpush2.msra.mxu0 0.0
  %567 = vmatprep.subr.mxu0 0.0
  %568 = vmatpush2.msra.mxu0 0.0
  %569 = vmatprep.subr.mxu0 0.0
  %570 = vmatpush2.msra.mxu0 0.0
  %571 = vmatprep.subr.mxu0 0.0
  %572 = vmatpush2.msra.mxu0 0.0
  %573 = vmatprep.subr.mxu0 0.0
  %574 = vmatpush2.msra.mxu0 0.0
  %575 = vmatprep.subr.mxu0 0.0
  %576 = vmatpush2.msra.mxu0 0.0
  %577 = vmatprep.mubr.f32.mxu0 0.0
  %578 = vmatmul.mubr.f32.gmra.mxu0 %v497
  %v579 = vpop.f32.mrf.mxu0
  %v580 = vadd.f32 %v481, %v579
  %v581 = vpop.f32.mrf.mxu0
  %582 = vmatprep.mubr.f32.mxu0 0.0
  %583 = vmatmul.mubr.f32.gmra.mxu0 %v499
  %v584 = vpop.f32.mrf.mxu0
  %v585 = vadd.f32 %v482, %v584
  %v586 = vpop.f32.mrf.mxu0
  %587 = vmatprep.mubr.f32.mxu0 0.0
  %588 = vmatmul.mubr.f32.gmra.mxu0 %v501
  %v589 = vpop.f32.mrf.mxu0
  %v590 = vadd.f32 %v483, %v589
  %v591 = vpop.f32.mrf.mxu0
  %592 = vmatprep.mubr.f32.mxu0 0.0
  %593 = vmatmul.mubr.f32.gmra.mxu0 %v503
  %v594 = vpop.f32.mrf.mxu0
  %v595 = vadd.f32 %v484, %v594
  %v596 = vpop.f32.mrf.mxu0
  %597 = vmatprep.mubr.f32.mxu0 0.0
  %598 = vmatmul.mubr.f32.gmra.mxu0 %v505
  %v599 = vpop.f32.mrf.mxu0
  %v600 = vadd.f32 %v485, %v599
  %v601 = vpop.f32.mrf.mxu0
  %602 = vmatprep.mubr.f32.mxu0 0.0
  %603 = vmatmul.mubr.f32.gmra.mxu0 %v507
  %v604 = vpop.f32.mrf.mxu0
  %v605 = vadd.f32 %v486, %v604
  %v606 = vpop.f32.mrf.mxu0
  %607 = vmatprep.mubr.f32.mxu0 0.0
  %608 = vmatmul.mubr.f32.gmra.mxu0 %v509
  %v609 = vpop.f32.mrf.mxu0
  %v610 = vadd.f32 %v487, %v609
  %v611 = vpop.f32.mrf.mxu0
  %612 = vmatprep.mubr.f32.mxu0 0.0
  %613 = vmatmul.mubr.f32.gmra.mxu0 %v511
  %v614 = vpop.f32.mrf.mxu0
  %v615 = vadd.f32 %v488, %v614
  %v616 = vpop.f32.mrf.mxu0
  %617 = vdwg.mxu0
  %v626 = vcombine.high %v580, %v580
  %v627 = vcombine.high %v585, %v585
  %v628 = vcombine.high %v590, %v590
  %v629 = vcombine.high %v595, %v595
  %v630 = vcombine.high %v600, %v600
  %v631 = vcombine.high %v605, %v605
  %v632 = vcombine.high %v610, %v610
  %v633 = vcombine.high %v615, %v615
  %v642 = vld [vmem:[%s5] sm:$0x1]
  %v644 = vlaneseq
  %v645 = vshrl.u32 %v644, 7
  %v646 = vsub.s32 0, %v645
  %v647 = vrot.slane %v642, %v646
  %v649 = vadd.f32 %v580, %v647
  %v650 = vadd.f32 %v626, %v647
  %v651 = vadd.f32 %v585, %v647
  %v652 = vadd.f32 %v627, %v647
  %v653 = vadd.f32 %v590, %v647
  %v654 = vadd.f32 %v628, %v647
  %v655 = vadd.f32 %v595, %v647
  %v656 = vadd.f32 %v629, %v647
  %v657 = vadd.f32 %v600, %v647
  %v658 = vadd.f32 %v630, %v647
  %v659 = vadd.f32 %v605, %v647
  %v660 = vadd.f32 %v631, %v647
  %v661 = vadd.f32 %v610, %v647
  %v662 = vadd.f32 %v632, %v647
  %v663 = vadd.f32 %v615, %v647
  %v664 = vadd.f32 %v633, %v647
  %v665 = vmax.f32 %v649, 0.0
  %v666 = vmax.f32 %v650, 0.0
  %v667 = vmax.f32 %v651, 0.0
  %v668 = vmax.f32 %v652, 0.0
  %v669 = vmax.f32 %v653, 0.0
  %v670 = vmax.f32 %v654, 0.0
  %v671 = vmax.f32 %v655, 0.0
  %v672 = vmax.f32 %v656, 0.0
  %v673 = vmax.f32 %v657, 0.0
  %v674 = vmax.f32 %v658, 0.0
  %v675 = vmax.f32 %v659, 0.0
  %v676 = vmax.f32 %v660, 0.0
  %v677 = vmax.f32 %v661, 0.0
  %v678 = vmax.f32 %v662, 0.0
  %v679 = vmax.f32 %v663, 0.0
  %v680 = vmax.f32 %v664, 0.0
  %v681 = vld [vmem:[%s6] sm:$0xff]
  %v682 = vld [vmem:[%s6 + $0x8] sm:$0xff]
  %v683 = vld [vmem:[%s6 + $0x10] sm:$0xff]
  %v684 = vld [vmem:[%s6 + $0x18] sm:$0xff]
  %v685 = vld [vmem:[%s6 + $0x20] sm:$0xff]
  %v686 = vld [vmem:[%s6 + $0x28] sm:$0xff]
  %v687 = vld [vmem:[%s6 + $0x30] sm:$0xff]
  %v688 = vld [vmem:[%s6 + $0x38] sm:$0xff]
  %v689 = vld [vmem:[%s7] sm:$0x1]
  %v691 = vlaneseq
  %v692 = vshrl.u32 %v691, 7
  %v693 = vsub.s32 0, %v692
  %v694 = vrot.slane %v689, %v693
  %v711 = vcombine.low %v665, %v666
  %v712 = vcombine.low %v667, %v668
  %v713 = vcombine.low %v669, %v670
  %v714 = vcombine.low %v671, %v672
  %v715 = vcombine.low %v673, %v674
  %v716 = vcombine.low %v675, %v676
  %v717 = vcombine.low %v677, %v678
  %v718 = vcombine.low %v679, %v680
  %v719 = vcombine.low %v694, %v694
  %vm721 = vcmask 523264
  %v722 = vsel %vm721, %v711, 0
  %v724 = vsel %vm721, %v712, 0
  %v726 = vsel %vm721, %v713, 0
  %v728 = vsel %vm721, %v714, 0
  %v730 = vsel %vm721, %v715, 0
  %v732 = vsel %vm721, %v716, 0
  %v734 = vsel %vm721, %v717, 0
  %v736 = vsel %vm721, %v718, 0
  %738 = vmatprep.subr.mxu0 0.0
  %739 = vmatpush1.msra.mxu0 0.0
  %740 = vmatprep.subr.mxu0 0.0
  %741 = vmatpush1.msra.mxu0 0.0
  %742 = vmatprep.subr.mxu0 0.0
  %743 = vmatpush1.msra.mxu0 0.0
  %744 = vmatprep.subr.mxu0 0.0
  %745 = vmatpush1.msra.mxu0 0.0
  %746 = vmatprep.subr.mxu0 0.0
  %747 = vmatpush1.msra.mxu0 0.0
  %748 = vmatprep.subr.mxu0 0.0
  %749 = vmatpush1.msra.mxu0 0.0
  %750 = vmatprep.subr.mxu0 0.0
  %751 = vmatpush1.msra.mxu0 0.0
  %752 = vmatprep.subr.mxu0 0.0
  %753 = vmatpush1.msra.mxu0 0.0
  %754 = vmatprep.subr.mxu0 0.0
  %755 = vmatpush1.msra.mxu0 %v688
  %756 = vmatprep.subr.mxu0 0.0
  %757 = vmatpush1.msra.mxu0 %v687
  %758 = vmatprep.subr.mxu0 0.0
  %759 = vmatpush1.msra.mxu0 %v686
  %760 = vmatprep.subr.mxu0 0.0
  %761 = vmatpush1.msra.mxu0 %v685
  %762 = vmatprep.subr.mxu0 0.0
  %763 = vmatpush1.msra.mxu0 %v684
  %764 = vmatprep.subr.mxu0 0.0
  %765 = vmatpush1.msra.mxu0 %v683
  %766 = vmatprep.subr.mxu0 0.0
  %767 = vmatpush1.msra.mxu0 %v682
  %768 = vmatprep.subr.mxu0 0.0
  %769 = vmatpush1.msra.mxu0 %v681
  %770 = vmatprep.subr.mxu0 0.0
  %771 = vmatpush2.msra.mxu0 0.0
  %772 = vmatprep.subr.mxu0 0.0
  %773 = vmatpush2.msra.mxu0 0.0
  %774 = vmatprep.subr.mxu0 0.0
  %775 = vmatpush2.msra.mxu0 0.0
  %776 = vmatprep.subr.mxu0 0.0
  %777 = vmatpush2.msra.mxu0 0.0
  %778 = vmatprep.subr.mxu0 0.0
  %779 = vmatpush2.msra.mxu0 0.0
  %780 = vmatprep.subr.mxu0 0.0
  %781 = vmatpush2.msra.mxu0 0.0
  %782 = vmatprep.subr.mxu0 0.0
  %783 = vmatpush2.msra.mxu0 0.0
  %784 = vmatprep.subr.mxu0 0.0
  %785 = vmatpush2.msra.mxu0 0.0
  %786 = vmatprep.subr.mxu0 0.0
  %787 = vmatpush2.msra.mxu0 0.0
  %788 = vmatprep.subr.mxu0 0.0
  %789 = vmatpush2.msra.mxu0 0.0
  %790 = vmatprep.subr.mxu0 0.0
  %791 = vmatpush2.msra.mxu0 0.0
  %792 = vmatprep.subr.mxu0 0.0
  %793 = vmatpush2.msra.mxu0 0.0
  %794 = vmatprep.subr.mxu0 0.0
  %795 = vmatpush2.msra.mxu0 0.0
  %796 = vmatprep.subr.mxu0 0.0
  %797 = vmatpush2.msra.mxu0 0.0
  %798 = vmatprep.subr.mxu0 0.0
  %799 = vmatpush2.msra.mxu0 0.0
  %800 = vmatprep.subr.mxu0 0.0
  %801 = vmatpush2.msra.mxu0 0.0
  %802 = vmatprep.mubr.f32.mxu0 0.0
  %803 = vmatmul.mubr.f32.gmra.mxu0 %v722
  %v804 = vpop.f32.mrf.mxu0
  %v805 = vadd.f32 %v719, %v804
  %v806 = vpop.f32.mrf.mxu0
  %807 = vmatprep.mubr.f32.mxu0 0.0
  %808 = vmatmul.mubr.f32.gmra.mxu0 %v724
  %v809 = vpop.f32.mrf.mxu0
  %v810 = vadd.f32 %v719, %v809
  %v811 = vpop.f32.mrf.mxu0
  %812 = vmatprep.mubr.f32.mxu0 0.0
  %813 = vmatmul.mubr.f32.gmra.mxu0 %v726
  %v814 = vpop.f32.mrf.mxu0
  %v815 = vadd.f32 %v719, %v814
  %v816 = vpop.f32.mrf.mxu0
  %817 = vmatprep.mubr.f32.mxu0 0.0
  %818 = vmatmul.mubr.f32.gmra.mxu0 %v728
  %v819 = vpop.f32.mrf.mxu0
  %v820 = vadd.f32 %v719, %v819
  %v821 = vpop.f32.mrf.mxu0
  %822 = vmatprep.mubr.f32.mxu0 0.0
  %823 = vmatmul.mubr.f32.gmra.mxu0 %v730
  %v824 = vpop.f32.mrf.mxu0
  %v825 = vadd.f32 %v719, %v824
  %v826 = vpop.f32.mrf.mxu0
  %827 = vmatprep.mubr.f32.mxu0 0.0
  %828 = vmatmul.mubr.f32.gmra.mxu0 %v732
  %v829 = vpop.f32.mrf.mxu0
  %v830 = vadd.f32 %v719, %v829
  %v831 = vpop.f32.mrf.mxu0
  %832 = vmatprep.mubr.f32.mxu0 0.0
  %833 = vmatmul.mubr.f32.gmra.mxu0 %v734
  %v834 = vpop.f32.mrf.mxu0
  %v835 = vadd.f32 %v719, %v834
  %v836 = vpop.f32.mrf.mxu0
  %837 = vmatprep.mubr.f32.mxu0 0.0
  %838 = vmatmul.mubr.f32.gmra.mxu0 %v736
  %v839 = vpop.f32.mrf.mxu0
  %v840 = vadd.f32 %v719, %v839
  %v841 = vpop.f32.mrf.mxu0
  %842 = vdwg.mxu0
  %v851 = vcombine.high %v805, %v805
  %v852 = vcombine.high %v810, %v810
  %v853 = vcombine.high %v815, %v815
  %v854 = vcombine.high %v820, %v820
  %v855 = vcombine.high %v825, %v825
  %v856 = vcombine.high %v830, %v830
  %v857 = vcombine.high %v835, %v835
  %v858 = vcombine.high %v840, %v840
  %vm867 = vcmask 257024
  %v868 = vsel %vm867, %v805, 0.0
  %v869 = vrot.slane %v868, 4
  %v870 = vadd.f32 %v868, %v869
  %v871 = vrot.slane %v870, 2
  %v872 = vadd.f32 %v870, %v871
  %v873 = vrot.slane %v872, 1
  %v874 = vadd.f32 %v872, %v873
  %v875 = vsel %vm867, %v851, 0.0
  %v876 = vrot.slane %v875, 4
  %v877 = vadd.f32 %v875, %v876
  %v878 = vrot.slane %v877, 2
  %v879 = vadd.f32 %v877, %v878
  %v880 = vrot.slane %v879, 1
  %v881 = vadd.f32 %v879, %v880
  %v882 = vsel %vm867, %v810, 0.0
  %v883 = vrot.slane %v882, 4
  %v884 = vadd.f32 %v882, %v883
  %v885 = vrot.slane %v884, 2
  %v886 = vadd.f32 %v884, %v885
  %v887 = vrot.slane %v886, 1
  %v888 = vadd.f32 %v886, %v887
  %v889 = vsel %vm867, %v852, 0.0
  %v890 = vrot.slane %v889, 4
  %v891 = vadd.f32 %v889, %v890
  %v892 = vrot.slane %v891, 2
  %v893 = vadd.f32 %v891, %v892
  %v894 = vrot.slane %v893, 1
  %v895 = vadd.f32 %v893, %v894
  %v896 = vsel %vm867, %v815, 0.0
  %v897 = vrot.slane %v896, 4
  %v898 = vadd.f32 %v896, %v897
  %v899 = vrot.slane %v898, 2
  %v900 = vadd.f32 %v898, %v899
  %v901 = vrot.slane %v900, 1
  %v902 = vadd.f32 %v900, %v901
  %v903 = vsel %vm867, %v853, 0.0
  %v904 = vrot.slane %v903, 4
  %v905 = vadd.f32 %v903, %v904
  %v906 = vrot.slane %v905, 2
  %v907 = vadd.f32 %v905, %v906
  %v908 = vrot.slane %v907, 1
  %v909 = vadd.f32 %v907, %v908
  %v910 = vsel %vm867, %v820, 0.0
  %v911 = vrot.slane %v910, 4
  %v912 = vadd.f32 %v910, %v911
  %v913 = vrot.slane %v912, 2
  %v914 = vadd.f32 %v912, %v913
  %v915 = vrot.slane %v914, 1
  %v916 = vadd.f32 %v914, %v915
  %v917 = vsel %vm867, %v854, 0.0
  %v918 = vrot.slane %v917, 4
  %v919 = vadd.f32 %v917, %v918
  %v920 = vrot.slane %v919, 2
  %v921 = vadd.f32 %v919, %v920
  %v922 = vrot.slane %v921, 1
  %v923 = vadd.f32 %v921, %v922
  %v924 = vsel %vm867, %v825, 0.0
  %v925 = vrot.slane %v924, 4
  %v926 = vadd.f32 %v924, %v925
  %v927 = vrot.slane %v926, 2
  %v928 = vadd.f32 %v926, %v927
  %v929 = vrot.slane %v928, 1
  %v930 = vadd.f32 %v928, %v929
  %v931 = vsel %vm867, %v855, 0.0
  %v932 = vrot.slane %v931, 4
  %v933 = vadd.f32 %v931, %v932
  %v934 = vrot.slane %v933, 2
  %v935 = vadd.f32 %v933, %v934
  %v936 = vrot.slane %v935, 1
  %v937 = vadd.f32 %v935, %v936
  %v938 = vsel %vm867, %v830, 0.0
  %v939 = vrot.slane %v938, 4
  %v940 = vadd.f32 %v938, %v939
  %v941 = vrot.slane %v940, 2
  %v942 = vadd.f32 %v940, %v941
  %v943 = vrot.slane %v942, 1
  %v944 = vadd.f32 %v942, %v943
  %v945 = vsel %vm867, %v856, 0.0
  %v946 = vrot.slane %v945, 4
  %v947 = vadd.f32 %v945, %v946
  %v948 = vrot.slane %v947, 2
  %v949 = vadd.f32 %v947, %v948
  %v950 = vrot.slane %v949, 1
  %v951 = vadd.f32 %v949, %v950
  %v952 = vsel %vm867, %v835, 0.0
  %v953 = vrot.slane %v952, 4
  %v954 = vadd.f32 %v952, %v953
  %v955 = vrot.slane %v954, 2
  %v956 = vadd.f32 %v954, %v955
  %v957 = vrot.slane %v956, 1
  %v958 = vadd.f32 %v956, %v957
  %v959 = vsel %vm867, %v857, 0.0
  %v960 = vrot.slane %v959, 4
  %v961 = vadd.f32 %v959, %v960
  %v962 = vrot.slane %v961, 2
  %v963 = vadd.f32 %v961, %v962
  %v964 = vrot.slane %v963, 1
  %v965 = vadd.f32 %v963, %v964
  %v966 = vsel %vm867, %v840, 0.0
  %v967 = vrot.slane %v966, 4
  %v968 = vadd.f32 %v966, %v967
  %v969 = vrot.slane %v968, 2
  %v970 = vadd.f32 %v968, %v969
  %v971 = vrot.slane %v970, 1
  %v972 = vadd.f32 %v970, %v971
  %v973 = vsel %vm867, %v858, 0.0
  %v974 = vrot.slane %v973, 4
  %v975 = vadd.f32 %v973, %v974
  %v976 = vrot.slane %v975, 2
  %v977 = vadd.f32 %v975, %v976
  %v978 = vrot.slane %v977, 1
  %v979 = vadd.f32 %v977, %v978
  %v980 = vadd.f32 %v805, 0.0
  %v981 = vadd.f32 %v851, 0.0
  %v982 = vadd.f32 %v810, 0.0
  %v983 = vadd.f32 %v852, 0.0
  %v984 = vadd.f32 %v815, 0.0
  %v985 = vadd.f32 %v853, 0.0
  %v986 = vadd.f32 %v820, 0.0
  %v987 = vadd.f32 %v854, 0.0
  %v988 = vadd.f32 %v825, 0.0
  %v989 = vadd.f32 %v855, 0.0
  %v990 = vadd.f32 %v830, 0.0
  %v991 = vadd.f32 %v856, 0.0
  %v992 = vadd.f32 %v835, 0.0
  %v993 = vadd.f32 %v857, 0.0
  %v994 = vadd.f32 %v840, 0.0
  %v995 = vadd.f32 %v858, 0.0
  %vm1012 = vcmask 1041409
  %v1013 = vsel %vm1012, %v881, %v874
  %vm1014 = vcmask 1042434
  %v1015 = vsel %vm1014, %v888, %v1013
  %vm1016 = vcmask 1043459
  %v1017 = vsel %vm1016, %v895, %v1015
  %vm1018 = vcmask 1044484
  %v1019 = vsel %vm1018, %v902, %v1017
  %vm1020 = vcmask 1045509
  %v1021 = vsel %vm1020, %v909, %v1019
  %vm1022 = vcmask 1046534
  %v1023 = vsel %vm1022, %v916, %v1021
  %vm1024 = vcmask 1047559
  %v1025 = vsel %vm1024, %v923, %v1023
  %v1026 = vsel %vm1012, %v937, %v930
  %v1027 = vsel %vm1014, %v944, %v1026
  %v1028 = vsel %vm1016, %v951, %v1027
  %v1029 = vsel %vm1018, %v958, %v1028
  %v1030 = vsel %vm1020, %v965, %v1029
  %v1031 = vsel %vm1022, %v972, %v1030
  %v1032 = vsel %vm1024, %v979, %v1031
  %1051 = vset.pattern.permute.xlu0 32
  %1052 = vperm.xlu0 %1051, %v980
  %v1053 = vpop.permute.xlu0 %1052
  %1054 = vset.pattern.permute.xlu0 32
  %1055 = vperm.xlu0 %1054, %v981
  %v1056 = vpop.permute.xlu0 %1055
  %1057 = vset.pattern.permute.xlu0 32
  %1058 = vperm.xlu0 %1057, %v982
  %v1059 = vpop.permute.xlu0 %1058
  %1060 = vset.pattern.permute.xlu0 32
  %1061 = vperm.xlu0 %1060, %v983
  %v1062 = vpop.permute.xlu0 %1061
  %1063 = vset.pattern.permute.xlu0 32
  %1064 = vperm.xlu0 %1063, %v984
  %v1065 = vpop.permute.xlu0 %1064
  %1066 = vset.pattern.permute.xlu0 32
  %1067 = vperm.xlu0 %1066, %v985
  %v1068 = vpop.permute.xlu0 %1067
  %1069 = vset.pattern.permute.xlu0 32
  %1070 = vperm.xlu0 %1069, %v986
  %v1071 = vpop.permute.xlu0 %1070
  %1072 = vset.pattern.permute.xlu0 32
  %1073 = vperm.xlu0 %1072, %v987
  %v1074 = vpop.permute.xlu0 %1073
  %1075 = vset.pattern.permute.xlu0 32
  %1076 = vperm.xlu0 %1075, %v988
  %v1077 = vpop.permute.xlu0 %1076
  %1078 = vset.pattern.permute.xlu0 32
  %1079 = vperm.xlu0 %1078, %v989
  %v1080 = vpop.permute.xlu0 %1079
  %1081 = vset.pattern.permute.xlu0 32
  %1082 = vperm.xlu0 %1081, %v990
  %v1083 = vpop.permute.xlu0 %1082
  %1084 = vset.pattern.permute.xlu0 32
  %1085 = vperm.xlu0 %1084, %v991
  %v1086 = vpop.permute.xlu0 %1085
  %1087 = vset.pattern.permute.xlu0 32
  %1088 = vperm.xlu0 %1087, %v992
  %v1089 = vpop.permute.xlu0 %1088
  %1090 = vset.pattern.permute.xlu0 32
  %1091 = vperm.xlu0 %1090, %v993
  %v1092 = vpop.permute.xlu0 %1091
  %1093 = vset.pattern.permute.xlu0 32
  %1094 = vperm.xlu0 %1093, %v994
  %v1095 = vpop.permute.xlu0 %1094
  %1096 = vset.pattern.permute.xlu0 32
  %1097 = vperm.xlu0 %1096, %v995
  %v1098 = vpop.permute.xlu0 %1097
  %v1099 = vlaneseq
  %v1100 = vand.u32 %v1099, 127
  %v1101 = vadd.s32 %v1100, 4294967264
  %v1102 = vlaneseq
  %v1103 = vshrl.u32 %v1102, 7
  %v1104 = vsub.s32 %v1101, %v1103
  %v1105 = vrot.slane %v1053, %v1104
  %v1106 = vlaneseq
  %v1107 = vshrl.u32 %v1106, 7
  %v1108 = vsub.s32 %v1101, %v1107
  %v1109 = vrot.slane %v1056, %v1108
  %v1110 = vlaneseq
  %v1111 = vshrl.u32 %v1110, 7
  %v1112 = vsub.s32 %v1101, %v1111
  %v1113 = vrot.slane %v1059, %v1112
  %v1114 = vlaneseq
  %v1115 = vshrl.u32 %v1114, 7
  %v1116 = vsub.s32 %v1101, %v1115
  %v1117 = vrot.slane %v1062, %v1116
  %v1118 = vlaneseq
  %v1119 = vshrl.u32 %v1118, 7
  %v1120 = vsub.s32 %v1101, %v1119
  %v1121 = vrot.slane %v1065, %v1120
  %v1122 = vlaneseq
  %v1123 = vshrl.u32 %v1122, 7
  %v1124 = vsub.s32 %v1101, %v1123
  %v1125 = vrot.slane %v1068, %v1124
  %v1126 = vlaneseq
  %v1127 = vshrl.u32 %v1126, 7
  %v1128 = vsub.s32 %v1101, %v1127
  %v1129 = vrot.slane %v1071, %v1128
  %v1130 = vlaneseq
  %v1131 = vshrl.u32 %v1130, 7
  %v1132 = vsub.s32 %v1101, %v1131
  %v1133 = vrot.slane %v1074, %v1132
  %v1134 = vlaneseq
  %v1135 = vshrl.u32 %v1134, 7
  %v1136 = vsub.s32 %v1101, %v1135
  %v1137 = vrot.slane %v1077, %v1136
  %v1138 = vlaneseq
  %v1139 = vshrl.u32 %v1138, 7
  %v1140 = vsub.s32 %v1101, %v1139
  %v1141 = vrot.slane %v1080, %v1140
  %v1142 = vlaneseq
  %v1143 = vshrl.u32 %v1142, 7
  %v1144 = vsub.s32 %v1101, %v1143
  %v1145 = vrot.slane %v1083, %v1144
  %v1146 = vlaneseq
  %v1147 = vshrl.u32 %v1146, 7
  %v1148 = vsub.s32 %v1101, %v1147
  %v1149 = vrot.slane %v1086, %v1148
  %v1150 = vlaneseq
  %v1151 = vshrl.u32 %v1150, 7
  %v1152 = vsub.s32 %v1101, %v1151
  %v1153 = vrot.slane %v1089, %v1152
  %v1154 = vlaneseq
  %v1155 = vshrl.u32 %v1154, 7
  %v1156 = vsub.s32 %v1101, %v1155
  %v1157 = vrot.slane %v1092, %v1156
  %v1158 = vlaneseq
  %v1159 = vshrl.u32 %v1158, 7
  %v1160 = vsub.s32 %v1101, %v1159
  %v1161 = vrot.slane %v1095, %v1160
  %v1162 = vlaneseq
  %v1163 = vshrl.u32 %v1162, 7
  %v1164 = vsub.s32 %v1101, %v1163
  %v1165 = vrot.slane %v1098, %v1164
  %v1166 = vsel %vm1012, %v1109, %v1105
  %v1167 = vsel %vm1014, %v1113, %v1166
  %v1168 = vsel %vm1016, %v1117, %v1167
  %v1169 = vsel %vm1018, %v1121, %v1168
  %v1170 = vsel %vm1020, %v1125, %v1169
  %v1171 = vsel %vm1022, %v1129, %v1170
  %v1172 = vsel %vm1024, %v1133, %v1171
  %v1173 = vsel %vm1012, %v1141, %v1137
  %v1174 = vsel %vm1014, %v1145, %v1173
  %v1175 = vsel %vm1016, %v1149, %v1174
  %v1176 = vsel %vm1018, %v1153, %v1175
  %v1177 = vsel %vm1020, %v1157, %v1176
  %v1178 = vsel %vm1022, %v1161, %v1177
  %v1179 = vsel %vm1024, %v1165, %v1178
  %vm1182 = vcmask 261120
  %v1183 = vsel %vm1182, %v1025, %v1172
  %v1184 = vsel %vm1182, %v1032, %v1179
  %vm1185 = vcmask 293888
  %1186 = vst.msk [vmem:[%s8] sm:$0xff] %vm1185, %v1183
  %1187 = vst.msk [vmem:[%s8 + $0x8] sm:$0xff] %vm1185, %v1184
  // Predicated region
  $region34: #{pgnn_forward.2} parent=0 // pred_check
    _
  $region35: #{pgnn_forward.2} parent=0 // pred_check_branch
    %1189 = sbr.rel (0) target = $region37
  $region36: #{pgnn_forward.2} parent=0 // pred_region
    _
  $region37: #{pgnn_forward.2} parent=0 // pred_fallthru
    _
  // Predicated region
  $region38: #{pgnn_forward.2} parent=0 // pred_check
    _
  $region39: #{pgnn_forward.2} parent=0 // pred_check_branch
    %1191 = sbr.rel (0) target = $region41
  $region40: #{pgnn_forward.2} parent=0 // pred_region
    _
  $region41: #{pgnn_forward.2} parent=0 // pred_fallthru
    _

// kernel: pgnn_forward.3
$region0: #{pgnn_forward.3}
  #allocation0 [shape = 'u32[]', space=smem, size = 0x4, offset = 0x4, fixed_abs, tag = 'smem constant byte address 0x4 - core index']
  #allocation1 [shape = 'u32[144,128]{1,0:T(1,128)}', space=vmem, size = 0x12000, scoped, tag = 'internal scratch']
  %s0 = inlined_call_operand.vmem [shape: f32[16,4,32], index: 0, kind: input, shape index: {}]
  %s1 = inlined_call_operand.vmem [shape: f32[16,4,1], index: 1, kind: input, shape index: {}]
  %s2 = inlined_call_operand.vmem [shape: f32[16,32], index: 2, kind: input, shape index: {}]
  %s3 = inlined_call_operand.vmem [shape: f32[32,64], index: 3, kind: input, shape index: {}]
  %s4 = inlined_call_operand.vmem [shape: f32[32,64], index: 4, kind: input, shape index: {}]
  %s5 = inlined_call_operand.vmem [shape: f32[1,64], index: 5, kind: input, shape index: {}]
  %s6 = inlined_call_operand.vmem [shape: f32[64,9], index: 6, kind: input, shape index: {}]
  %s7 = inlined_call_operand.vmem [shape: f32[1,9], index: 7, kind: input, shape index: {}]
  %s8 = inlined_call_operand.vmem [shape: f32[16,12], index: 8, kind: output, shape index: {}]
  %s9 = sld [smem:[#allocation0]]
  $region42: #{pgnn_forward.3} parent=0
    _
  %s11 = ssub.s32 1, %s9
  %s12 = scalar_select 0, %s11, %s9
  // Predicated region
  $region2: #{pgnn_forward.3} parent=0 // pred_check
    _
  $region3: #{pgnn_forward.3} parent=0 // pred_check_branch
    %14 = sbr.rel (0) target = $region5
  $region4: #{pgnn_forward.3} parent=0 // pred_region
    _
  $region5: #{pgnn_forward.3} parent=0 // pred_fallthru
    _
  // Predicated region
  $region6: #{pgnn_forward.3} parent=0 // pred_check
    _
  $region7: #{pgnn_forward.3} parent=0 // pred_check_branch
    %16 = sbr.rel (0) target = $region9
  $region8: #{pgnn_forward.3} parent=0 // pred_region
    _
  $region9: #{pgnn_forward.3} parent=0 // pred_fallthru
    _
  // Predicated region
  $region10: #{pgnn_forward.3} parent=0 // pred_check
    _
  $region11: #{pgnn_forward.3} parent=0 // pred_check_branch
    %18 = sbr.rel (0) target = $region13
  $region12: #{pgnn_forward.3} parent=0 // pred_region
    _
  $region13: #{pgnn_forward.3} parent=0 // pred_fallthru
    _
  // Predicated region
  $region14: #{pgnn_forward.3} parent=0 // pred_check
    _
  $region15: #{pgnn_forward.3} parent=0 // pred_check_branch
    %20 = sbr.rel (0) target = $region17
  $region16: #{pgnn_forward.3} parent=0 // pred_region
    _
  $region17: #{pgnn_forward.3} parent=0 // pred_fallthru
    _
  // Predicated region
  $region18: #{pgnn_forward.3} parent=0 // pred_check
    _
  $region19: #{pgnn_forward.3} parent=0 // pred_check_branch
    %22 = sbr.rel (0) target = $region21
  $region20: #{pgnn_forward.3} parent=0 // pred_region
    _
  $region21: #{pgnn_forward.3} parent=0 // pred_fallthru
    _
  // Predicated region
  $region22: #{pgnn_forward.3} parent=0 // pred_check
    _
  $region23: #{pgnn_forward.3} parent=0 // pred_check_branch
    %24 = sbr.rel (0) target = $region25
  $region24: #{pgnn_forward.3} parent=0 // pred_region
    _
  $region25: #{pgnn_forward.3} parent=0 // pred_fallthru
    _
  // Predicated region
  $region26: #{pgnn_forward.3} parent=0 // pred_check
    _
  $region27: #{pgnn_forward.3} parent=0 // pred_check_branch
    %26 = sbr.rel (0) target = $region29
  $region28: #{pgnn_forward.3} parent=0 // pred_region
    _
  $region29: #{pgnn_forward.3} parent=0 // pred_fallthru
    _
  // Predicated region
  $region30: #{pgnn_forward.3} parent=0 // pred_check
    _
  $region31: #{pgnn_forward.3} parent=0 // pred_check_branch
    %28 = sbr.rel (0) target = $region33
  $region32: #{pgnn_forward.3} parent=0 // pred_region
    _
  $region33: #{pgnn_forward.3} parent=0 // pred_fallthru
    _
  %v29 = vld [vmem:[%s1] sm:$0xf]
  %v30 = vld [vmem:[%s1 + $0x4] sm:$0xf]
  %v31 = vld [vmem:[%s1 + $0x8] sm:$0xf]
  %v32 = vld [vmem:[%s1 + $0xc] sm:$0xf]
  %v33 = vld [vmem:[%s1 + $0x10] sm:$0xf]
  %v34 = vld [vmem:[%s1 + $0x14] sm:$0xf]
  %v35 = vld [vmem:[%s1 + $0x18] sm:$0xf]
  %v36 = vld [vmem:[%s1 + $0x1c] sm:$0xf]
  %v37 = vld [vmem:[%s1 + $0x20] sm:$0xf]
  %v38 = vld [vmem:[%s1 + $0x24] sm:$0xf]
  %v39 = vld [vmem:[%s1 + $0x28] sm:$0xf]
  %v40 = vld [vmem:[%s1 + $0x2c] sm:$0xf]
  %v41 = vld [vmem:[%s1 + $0x30] sm:$0xf]
  %v42 = vld [vmem:[%s1 + $0x34] sm:$0xf]
  %v43 = vld [vmem:[%s1 + $0x38] sm:$0xf]
  %v44 = vld [vmem:[%s1 + $0x3c] sm:$0xf]
  %v45 = vld [vmem:[%s0] sm:$0xf]
  %v46 = vld [vmem:[%s0 + $0x4] sm:$0xf]
  %v47 = vld [vmem:[%s0 + $0x8] sm:$0xf]
  %v48 = vld [vmem:[%s0 + $0xc] sm:$0xf]
  %v49 = vld [vmem:[%s0 + $0x10] sm:$0xf]
  %v50 = vld [vmem:[%s0 + $0x14] sm:$0xf]
  %v51 = vld [vmem:[%s0 + $0x18] sm:$0xf]
  %v52 = vld [vmem:[%s0 + $0x1c] sm:$0xf]
  %v53 = vld [vmem:[%s0 + $0x20] sm:$0xf]
  %v54 = vld [vmem:[%s0 + $0x24] sm:$0xf]
  %v55 = vld [vmem:[%s0 + $0x28] sm:$0xf]
  %v56 = vld [vmem:[%s0 + $0x2c] sm:$0xf]
  %v57 = vld [vmem:[%s0 + $0x30] sm:$0xf]
  %v58 = vld [vmem:[%s0 + $0x34] sm:$0xf]
  %v59 = vld [vmem:[%s0 + $0x38] sm:$0xf]
  %v60 = vld [vmem:[%s0 + $0x3c] sm:$0xf]
  %62 = vset.pattern.permute.xlu0 0
  %63 = vperm.xlu0 %62, %v29
  %v64 = vpop.permute.xlu0 %63
  %67 = vset.pattern.permute.xlu0 0
  %68 = vperm.xlu0 %67, %v30
  %v69 = vpop.permute.xlu0 %68
  %72 = vset.pattern.permute.xlu0 0
  %73 = vperm.xlu0 %72, %v31
  %v74 = vpop.permute.xlu0 %73
  %77 = vset.pattern.permute.xlu0 0
  %78 = vperm.xlu0 %77, %v32
  %v79 = vpop.permute.xlu0 %78
  %82 = vset.pattern.permute.xlu0 0
  %83 = vperm.xlu0 %82, %v33
  %v84 = vpop.permute.xlu0 %83
  %87 = vset.pattern.permute.xlu0 0
  %88 = vperm.xlu0 %87, %v34
  %v89 = vpop.permute.xlu0 %88
  %92 = vset.pattern.permute.xlu0 0
  %93 = vperm.xlu0 %92, %v35
  %v94 = vpop.permute.xlu0 %93
  %97 = vset.pattern.permute.xlu0 0
  %98 = vperm.xlu0 %97, %v36
  %v99 = vpop.permute.xlu0 %98
  %102 = vset.pattern.permute.xlu0 0
  %103 = vperm.xlu0 %102, %v37
  %v104 = vpop.permute.xlu0 %103
  %107 = vset.pattern.permute.xlu0 0
  %108 = vperm.xlu0 %107, %v38
  %v109 = vpop.permute.xlu0 %108
  %112 = vset.pattern.permute.xlu0 0
  %113 = vperm.xlu0 %112, %v39
  %v114 = vpop.permute.xlu0 %113
  %117 = vset.pattern.permute.xlu0 0
  %118 = vperm.xlu0 %117, %v40
  %v119 = vpop.permute.xlu0 %118
  %122 = vset.pattern.permute.xlu0 0
  %123 = vperm.xlu0 %122, %v41
  %v124 = vpop.permute.xlu0 %123
  %127 = vset.pattern.permute.xlu0 0
  %128 = vperm.xlu0 %127, %v42
  %v129 = vpop.permute.xlu0 %128
  %132 = vset.pattern.permute.xlu0 0
  %133 = vperm.xlu0 %132, %v43
  %v134 = vpop.permute.xlu0 %133
  %137 = vset.pattern.permute.xlu0 0
  %138 = vperm.xlu0 %137, %v44
  %v139 = vpop.permute.xlu0 %138
  %v141 = vmul.f32 %v45, %v64
  %v142 = vmul.f32 %v46, %v69
  %v143 = vmul.f32 %v47, %v74
  %v144 = vmul.f32 %v48, %v79
  %v145 = vmul.f32 %v49, %v84
  %v146 = vmul.f32 %v50, %v89
  %v147 = vmul.f32 %v51, %v94
  %v148 = vmul.f32 %v52, %v99
  %v149 = vmul.f32 %v53, %v104
  %v150 = vmul.f32 %v54, %v109
  %v151 = vmul.f32 %v55, %v114
  %v152 = vmul.f32 %v56, %v119
  %v153 = vmul.f32 %v57, %v124
  %v154 = vmul.f32 %v58, %v129
  %v155 = vmul.f32 %v59, %v134
  %v156 = vmul.f32 %v60, %v139
  %v157 = vld [vmem:[%s3] sm:$0xff]
  %v158 = vld [vmem:[%s3 + $0x8] sm:$0xff]
  %v159 = vld [vmem:[%s3 + $0x10] sm:$0xff]
  %v160 = vld [vmem:[%s3 + $0x18] sm:$0xff]
  %v161 = vld [vmem:[%s2] sm:$0xff]
  %v162 = vld [vmem:[%s2 + $0x8] sm:$0xff]
  %v163 = vld [vmem:[%s4] sm:$0xff]
  %v164 = vld [vmem:[%s4 + $0x8] sm:$0xff]
  %v165 = vld [vmem:[%s4 + $0x10] sm:$0xff]
  %v166 = vld [vmem:[%s4 + $0x18] sm:$0xff]
  %vm167 = vcmask 261120
  %v169 = vsel %vm167, %v161, 0
  %v172 = vsel %vm167, %v162, 0
  %174 = vmatprep.subr.mxu0 0.0
  %175 = vmatpush1.msra.mxu0 0.0
  %176 = vmatprep.subr.mxu0 0.0
  %177 = vmatpush1.msra.mxu0 0.0
  %178 = vmatprep.subr.mxu0 0.0
  %179 = vmatpush1.msra.mxu0 0.0
  %180 = vmatprep.subr.mxu0 0.0
  %181 = vmatpush1.msra.mxu0 0.0
  %182 = vmatprep.subr.mxu0 0.0
  %183 = vmatpush1.msra.mxu0 0.0
  %184 = vmatprep.subr.mxu0 0.0
  %185 = vmatpush1.msra.mxu0 0.0
  %186 = vmatprep.subr.mxu0 0.0
  %187 = vmatpush1.msra.mxu0 0.0
  %188 = vmatprep.subr.mxu0 0.0
  %189 = vmatpush1.msra.mxu0 0.0
  %190 = vmatprep.subr.mxu0 0.0
  %191 = vmatpush1.msra.mxu0 0.0
  %192 = vmatprep.subr.mxu0 0.0
  %193 = vmatpush1.msra.mxu0 0.0
  %194 = vmatprep.subr.mxu0 0.0
  %195 = vmatpush1.msra.mxu0 0.0
  %196 = vmatprep.subr.mxu0 0.0
  %197 = vmatpush1.msra.mxu0 0.0
  %198 = vmatprep.subr.mxu0 0.0
  %199 = vmatpush1.msra.mxu0 %v166
  %200 = vmatprep.subr.mxu0 0.0
  %201 = vmatpush1.msra.mxu0 %v165
  %202 = vmatprep.subr.mxu0 0.0
  %203 = vmatpush1.msra.mxu0 %v164
  %204 = vmatprep.subr.mxu0 0.0
  %205 = vmatpush1.msra.mxu0 %v163
  %206 = vmatprep.subr.mxu0 0.0
  %207 = vmatpush2.msra.mxu0 0.0
  %208 = vmatprep.subr.mxu0 0.0
  %209 = vmatpush2.msra.mxu0 0.0
  %210 = vmatprep.subr.mxu0 0.0
  %211 = vmatpush2.msra.mxu0 0.0
  %212 = vmatprep.subr.mxu0 0.0
  %213 = vmatpush2.msra.mxu0 0.0
  %214 = vmatprep.subr.mxu0 0.0
  %215 = vmatpush2.msra.mxu0 0.0
  %216 = vmatprep.subr.mxu0 0.0
  %217 = vmatpush2.msra.mxu0 0.0
  %218 = vmatprep.subr.mxu0 0.0
  %219 = vmatpush2.msra.mxu0 0.0
  %220 = vmatprep.subr.mxu0 0.0
  %221 = vmatpush2.msra.mxu0 0.0
  %222 = vmatprep.subr.mxu0 0.0
  %223 = vmatpush2.msra.mxu0 0.0
  %224 = vmatprep.subr.mxu0 0.0
  %225 = vmatpush2.msra.mxu0 0.0
  %226 = vmatprep.subr.mxu0 0.0
  %227 = vmatpush2.msra.mxu0 0.0
  %228 = vmatprep.subr.mxu0 0.0
  %229 = vmatpush2.msra.mxu0 0.0
  %230 = vmatprep.subr.mxu0 0.0
  %231 = vmatpush2.msra.mxu0 0.0
  %232 = vmatprep.subr.mxu0 0.0
  %233 = vmatpush2.msra.mxu0 0.0
  %234 = vmatprep.subr.mxu0 0.0
  %235 = vmatpush2.msra.mxu0 0.0
  %236 = vmatprep.subr.mxu0 0.0
  %237 = vmatpush2.msra.mxu0 0.0
  %238 = vmatprep.mubr.f32.mxu0 0.0
  %239 = vmatmul.mubr.f32.gmra.mxu0 %v169
  %v240 = vpop.f32.mrf.mxu0
  %v241 = vadd.f32 0.0, %v240
  %v242 = vpop.f32.mrf.mxu0
  %243 = vmatprep.mubr.f32.mxu0 0.0
  %244 = vmatmul.mubr.f32.gmra.mxu0 %v172
  %v245 = vpop.f32.mrf.mxu0
  %v246 = vadd.f32 0.0, %v245
  %v247 = vpop.f32.mrf.mxu0
  %248 = vdwg.mxu0
  %v251 = vcombine.high %v241, %v241
  %v253 = vunpack.c.l.s4 1966171168
  %v254 = vunpack.c.0.s8 %v253
  %v255 = vlaneseq
  %v256 = vshrl.u32 %v255, 7
  %v257 = vsub.s32 %v254, %v256
  %v258 = vrot.slane %v241, %v257
  %v260 = vunpack.c.l.s4 1966171168
  %v261 = vunpack.c.0.s8 %v260
  %v262 = vlaneseq
  %v263 = vshrl.u32 %v262, 7
  %v264 = vsub.s32 %v261, %v263
  %v265 = vrot.slane %v251, %v264
  %v266 = vcombine.high %v258, %v258
  %v267 = vcombine.high %v265, %v265
  %v269 = vunpack.c.l.s4 1966171168
  %v270 = vunpack.c.0.s8 %v269
  %v271 = vlaneseq
  %v272 = vshrl.u32 %v271, 7
  %v273 = vsub.s32 %v270, %v272
  %v274 = vrot.slane %v258, %v273
  %v276 = vunpack.c.l.s4 1966171168
  %v277 = vunpack.c.0.s8 %v276
  %v278 = vlaneseq
  %v279 = vshrl.u32 %v278, 7
  %v280 = vsub.s32 %v277, %v279
  %v281 = vrot.slane %v265, %v280
  %v283 = vunpack.c.l.s4 1966171168
  %v284 = vunpack.c.0.s8 %v283
  %v285 = vlaneseq
  %v286 = vshrl.u32 %v285, 7
  %v287 = vsub.s32 %v284, %v286
  %v288 = vrot.slane %v266, %v287
  %v290 = vunpack.c.l.s4 1966171168
  %v291 = vunpack.c.0.s8 %v290
  %v292 = vlaneseq
  %v293 = vshrl.u32 %v292, 7
  %v294 = vsub.s32 %v291, %v293
  %v295 = vrot.slane %v267, %v294
  %v296 = vcombine.high %v274, %v274
  %v297 = vcombine.high %v281, %v281
  %v298 = vcombine.high %v288, %v288
  %v299 = vcombine.high %v295, %v295
  %v300 = vcombine.high %v246, %v246
  %v302 = vunpack.c.l.s4 1966171168
  %v303 = vunpack.c.0.s8 %v302
  %v304 = vlaneseq
  %v305 = vshrl.u32 %v304, 7
  %v306 = vsub.s32 %v303, %v305
  %v307 = vrot.slane %v246, %v306
  %v309 = vunpack.c.l.s4 1966171168
  %v310 = vunpack.c.0.s8 %v309
  %v311 = vlaneseq
  %v312 = vshrl.u32 %v311, 7
  %v313 = vsub.s32 %v310, %v312
  %v314 = vrot.slane %v300, %v313
  %v315 = vcombine.high %v307, %v307
  %v316 = vcombine.high %v314, %v314
  %v318 = vunpack.c.l.s4 1966171168
  %v319 = vunpack.c.0.s8 %v318
  %v320 = vlaneseq
  %v321 = vshrl.u32 %v320, 7
  %v322 = vsub.s32 %v319, %v321
  %v323 = vrot.slane %v307, %v322
  %v325 = vunpack.c.l.s4 1966171168
  %v326 = vunpack.c.0.s8 %v325
  %v327 = vlaneseq
  %v328 = vshrl.u32 %v327, 7
  %v329 = vsub.s32 %v326, %v328
  %v330 = vrot.slane %v314, %v329
  %v332 = vunpack.c.l.s4 1966171168
  %v333 = vunpack.c.0.s8 %v332
  %v334 = vlaneseq
  %v335 = vshrl.u32 %v334, 7
  %v336 = vsub.s32 %v333, %v335
  %v337 = vrot.slane %v315, %v336
  %v339 = vunpack.c.l.s4 1966171168
  %v340 = vunpack.c.0.s8 %v339
  %v341 = vlaneseq
  %v342 = vshrl.u32 %v341, 7
  %v343 = vsub.s32 %v340, %v342
  %v344 = vrot.slane %v316, %v343
  %v345 = vcombine.high %v323, %v323
  %v346 = vcombine.high %v330, %v330
  %v347 = vcombine.high %v337, %v337
  %v348 = vcombine.high %v344, %v344
  %v349 = vlaneseq
  %v350 = vshrl.u32 %v349, 7
  %v351 = vsub.s32 0, %v350
  %v352 = vrot.slane %v274, %v351
  %v353 = vlaneseq
  %v354 = vshrl.u32 %v353, 7
  %v355 = vsub.s32 0, %v354
  %v356 = vrot.slane %v288, %v355
  %v357 = vlaneseq
  %v358 = vshrl.u32 %v357, 7
  %v359 = vsub.s32 0, %v358
  %v360 = vrot.slane %v296, %v359
  %v361 = vlaneseq
  %v362 = vshrl.u32 %v361, 7
  %v363 = vsub.s32 0, %v362
  %v364 = vrot.slane %v298, %v363
  %v365 = vlaneseq
  %v366 = vshrl.u32 %v365, 7
  %v367 = vsub.s32 0, %v366
  %v368 = vrot.slane %v281, %v367
  %v369 = vlaneseq
  %v370 = vshrl.u32 %v369, 7
  %v371 = vsub.s32 0, %v370
  %v372 = vrot.slane %v295, %v371
  %v373 = vlaneseq
  %v374 = vshrl.u32 %v373, 7
  %v375 = vsub.s32 0, %v374
  %v376 = vrot.slane %v297, %v375
  %v377 = vlaneseq
  %v378 = vshrl.u32 %v377, 7
  %v379 = vsub.s32 0, %v378
  %v380 = vrot.slane %v299, %v379
  %v381 = vlaneseq
  %v382 = vshrl.u32 %v381, 7
  %v383 = vsub.s32 0, %v382
  %v384 = vrot.slane %v323, %v383
  %v385 = vlaneseq
  %v386 = vshrl.u32 %v385, 7
  %v387 = vsub.s32 0, %v386
  %v388 = vrot.slane %v337, %v387
  %v389 = vlaneseq
  %v390 = vshrl.u32 %v389, 7
  %v391 = vsub.s32 0, %v390
  %v392 = vrot.slane %v345, %v391
  %v393 = vlaneseq
  %v394 = vshrl.u32 %v393, 7
  %v395 = vsub.s32 0, %v394
  %v396 = vrot.slane %v347, %v395
  %v397 = vlaneseq
  %v398 = vshrl.u32 %v397, 7
  %v399 = vsub.s32 0, %v398
  %v400 = vrot.slane %v330, %v399
  %v401 = vlaneseq
  %v402 = vshrl.u32 %v401, 7
  %v403 = vsub.s32 0, %v402
  %v404 = vrot.slane %v344, %v403
  %v405 = vlaneseq
  %v406 = vshrl.u32 %v405, 7
  %v407 = vsub.s32 0, %v406
  %v408 = vrot.slane %v346, %v407
  %v409 = vlaneseq
  %v410 = vshrl.u32 %v409, 7
  %v411 = vsub.s32 0, %v410
  %v412 = vrot.slane %v348, %v411
  %v429 = vmul.f32 %v64, %v352
  %v430 = vmul.f32 %v69, %v356
  %v431 = vmul.f32 %v74, %v360
  %v432 = vmul.f32 %v79, %v364
  %v433 = vmul.f32 %v84, %v368
  %v434 = vmul.f32 %v89, %v372
  %v435 = vmul.f32 %v94, %v376
  %v436 = vmul.f32 %v99, %v380
  %v437 = vmul.f32 %v104, %v384
  %v438 = vmul.f32 %v109, %v388
  %v439 = vmul.f32 %v114, %v392
  %v440 = vmul.f32 %v119, %v396
  %v441 = vmul.f32 %v124, %v400
  %v442 = vmul.f32 %v129, %v404
  %v443 = vmul.f32 %v134, %v408
  %v444 = vmul.f32 %v139, %v412
  %v461 = vcombine.low %v141, %v142
  %v462 = vcombine.low %v143, %v144
  %v463 = vcombine.low %v145, %v146
  %v464 = vcombine.low %v147, %v148
  %v465 = vcombine.low %v149, %v150
  %v466 = vcombine.low %v151, %v152
  %v467 = vcombine.low %v153, %v154
  %v468 = vcombine.low %v155, %v156
  %v485 = vcombine.low %v429, %v430
  %v486 = vcombine.low %v431, %v432
  %v487 = vcombine.low %v433, %v434
  %v488 = vcombine.low %v435, %v436
  %v489 = vcombine.low %v437, %v438
  %v490 = vcombine.low %v439, %v440
  %v491 = vcombine.low %v441, %v442
  %v492 = vcombine.low %v443, %v444
  %v501 = vsel %vm167, %v461, 0
  %v503 = vsel %vm167, %v462, 0
  %v505 = vsel %vm167, %v463, 0
  %v507 = vsel %vm167, %v464, 0
  %v509 = vsel %vm167, %v465, 0
  %v511 = vsel %vm167, %v466, 0
  %v513 = vsel %vm167, %v467, 0
  %v515 = vsel %vm167, %v468, 0
  %517 = vmatprep.subr.mxu0 0.0
  %518 = vmatpush1.msra.mxu0 0.0
  %519 = vmatprep.subr.mxu0 0.0
  %520 = vmatpush1.msra.mxu0 0.0
  %521 = vmatprep.subr.mxu0 0.0
  %522 = vmatpush1.msra.mxu0 0.0
  %523 = vmatprep.subr.mxu0 0.0
  %524 = vmatpush1.msra.mxu0 0.0
  %525 = vmatprep.subr.mxu0 0.0
  %526 = vmatpush1.msra.mxu0 0.0
  %527 = vmatprep.subr.mxu0 0.0
  %528 = vmatpush1.msra.mxu0 0.0
  %529 = vmatprep.subr.mxu0 0.0
  %530 = vmatpush1.msra.mxu0 0.0
  %531 = vmatprep.subr.mxu0 0.0
  %532 = vmatpush1.msra.mxu0 0.0
  %533 = vmatprep.subr.mxu0 0.0
  %534 = vmatpush1.msra.mxu0 0.0
  %535 = vmatprep.subr.mxu0 0.0
  %536 = vmatpush1.msra.mxu0 0.0
  %537 = vmatprep.subr.mxu0 0.0
  %538 = vmatpush1.msra.mxu0 0.0
  %539 = vmatprep.subr.mxu0 0.0
  %540 = vmatpush1.msra.mxu0 0.0
  %541 = vmatprep.subr.mxu0 0.0
  %542 = vmatpush1.msra.mxu0 %v160
  %543 = vmatprep.subr.mxu0 0.0
  %544 = vmatpush1.msra.mxu0 %v159
  %545 = vmatprep.subr.mxu0 0.0
  %546 = vmatpush1.msra.mxu0 %v158
  %547 = vmatprep.subr.mxu0 0.0
  %548 = vmatpush1.msra.mxu0 %v157
  %549 = vmatprep.subr.mxu0 0.0
  %550 = vmatpush2.msra.mxu0 0.0
  %551 = vmatprep.subr.mxu0 0.0
  %552 = vmatpush2.msra.mxu0 0.0
  %553 = vmatprep.subr.mxu0 0.0
  %554 = vmatpush2.msra.mxu0 0.0
  %555 = vmatprep.subr.mxu0 0.0
  %556 = vmatpush2.msra.mxu0 0.0
  %557 = vmatprep.subr.mxu0 0.0
  %558 = vmatpush2.msra.mxu0 0.0
  %559 = vmatprep.subr.mxu0 0.0
  %560 = vmatpush2.msra.mxu0 0.0
  %561 = vmatprep.subr.mxu0 0.0
  %562 = vmatpush2.msra.mxu0 0.0
  %563 = vmatprep.subr.mxu0 0.0
  %564 = vmatpush2.msra.mxu0 0.0
  %565 = vmatprep.subr.mxu0 0.0
  %566 = vmatpush2.msra.mxu0 0.0
  %567 = vmatprep.subr.mxu0 0.0
  %568 = vmatpush2.msra.mxu0 0.0
  %569 = vmatprep.subr.mxu0 0.0
  %570 = vmatpush2.msra.mxu0 0.0
  %571 = vmatprep.subr.mxu0 0.0
  %572 = vmatpush2.msra.mxu0 0.0
  %573 = vmatprep.subr.mxu0 0.0
  %574 = vmatpush2.msra.mxu0 0.0
  %575 = vmatprep.subr.mxu0 0.0
  %576 = vmatpush2.msra.mxu0 0.0
  %577 = vmatprep.subr.mxu0 0.0
  %578 = vmatpush2.msra.mxu0 0.0
  %579 = vmatprep.subr.mxu0 0.0
  %580 = vmatpush2.msra.mxu0 0.0
  %581 = vmatprep.mubr.f32.mxu0 0.0
  %582 = vmatmul.mubr.f32.gmra.mxu0 %v501
  %v583 = vpop.f32.mrf.mxu0
  %v584 = vadd.f32 %v485, %v583
  %v585 = vpop.f32.mrf.mxu0
  %586 = vmatprep.mubr.f32.mxu0 0.0
  %587 = vmatmul.mubr.f32.gmra.mxu0 %v503
  %v588 = vpop.f32.mrf.mxu0
  %v589 = vadd.f32 %v486, %v588
  %v590 = vpop.f32.mrf.mxu0
  %591 = vmatprep.mubr.f32.mxu0 0.0
  %592 = vmatmul.mubr.f32.gmra.mxu0 %v505
  %v593 = vpop.f32.mrf.mxu0
  %v594 = vadd.f32 %v487, %v593
  %v595 = vpop.f32.mrf.mxu0
  %596 = vmatprep.mubr.f32.mxu0 0.0
  %597 = vmatmul.mubr.f32.gmra.mxu0 %v507
  %v598 = vpop.f32.mrf.mxu0
  %v599 = vadd.f32 %v488, %v598
  %v600 = vpop.f32.mrf.mxu0
  %601 = vmatprep.mubr.f32.mxu0 0.0
  %602 = vmatmul.mubr.f32.gmra.mxu0 %v509
  %v603 = vpop.f32.mrf.mxu0
  %v604 = vadd.f32 %v489, %v603
  %v605 = vpop.f32.mrf.mxu0
  %606 = vmatprep.mubr.f32.mxu0 0.0
  %607 = vmatmul.mubr.f32.gmra.mxu0 %v511
  %v608 = vpop.f32.mrf.mxu0
  %v609 = vadd.f32 %v490, %v608
  %v610 = vpop.f32.mrf.mxu0
  %611 = vmatprep.mubr.f32.mxu0 0.0
  %612 = vmatmul.mubr.f32.gmra.mxu0 %v513
  %v613 = vpop.f32.mrf.mxu0
  %v614 = vadd.f32 %v491, %v613
  %v615 = vpop.f32.mrf.mxu0
  %616 = vmatprep.mubr.f32.mxu0 0.0
  %617 = vmatmul.mubr.f32.gmra.mxu0 %v515
  %v618 = vpop.f32.mrf.mxu0
  %v619 = vadd.f32 %v492, %v618
  %v620 = vpop.f32.mrf.mxu0
  %621 = vdwg.mxu0
  %v630 = vcombine.high %v584, %v584
  %v631 = vcombine.high %v589, %v589
  %v632 = vcombine.high %v594, %v594
  %v633 = vcombine.high %v599, %v599
  %v634 = vcombine.high %v604, %v604
  %v635 = vcombine.high %v609, %v609
  %v636 = vcombine.high %v614, %v614
  %v637 = vcombine.high %v619, %v619
  %v646 = vld [vmem:[%s5] sm:$0x1]
  %v648 = vlaneseq
  %v649 = vshrl.u32 %v648, 7
  %v650 = vsub.s32 0, %v649
  %v651 = vrot.slane %v646, %v650
  %v653 = vadd.f32 %v584, %v651
  %v654 = vadd.f32 %v630, %v651
  %v655 = vadd.f32 %v589, %v651
  %v656 = vadd.f32 %v631, %v651
  %v657 = vadd.f32 %v594, %v651
  %v658 = vadd.f32 %v632, %v651
  %v659 = vadd.f32 %v599, %v651
  %v660 = vadd.f32 %v633, %v651
  %v661 = vadd.f32 %v604, %v651
  %v662 = vadd.f32 %v634, %v651
  %v663 = vadd.f32 %v609, %v651
  %v664 = vadd.f32 %v635, %v651
  %v665 = vadd.f32 %v614, %v651
  %v666 = vadd.f32 %v636, %v651
  %v667 = vadd.f32 %v619, %v651
  %v668 = vadd.f32 %v637, %v651
  %v669 = vmax.f32 %v653, 0.0
  %v670 = vmax.f32 %v654, 0.0
  %v671 = vmax.f32 %v655, 0.0
  %v672 = vmax.f32 %v656, 0.0
  %v673 = vmax.f32 %v657, 0.0
  %v674 = vmax.f32 %v658, 0.0
  %v675 = vmax.f32 %v659, 0.0
  %v676 = vmax.f32 %v660, 0.0
  %v677 = vmax.f32 %v661, 0.0
  %v678 = vmax.f32 %v662, 0.0
  %v679 = vmax.f32 %v663, 0.0
  %v680 = vmax.f32 %v664, 0.0
  %v681 = vmax.f32 %v665, 0.0
  %v682 = vmax.f32 %v666, 0.0
  %v683 = vmax.f32 %v667, 0.0
  %v684 = vmax.f32 %v668, 0.0
  %v685 = vld [vmem:[%s6] sm:$0xff]
  %v686 = vld [vmem:[%s6 + $0x8] sm:$0xff]
  %v687 = vld [vmem:[%s6 + $0x10] sm:$0xff]
  %v688 = vld [vmem:[%s6 + $0x18] sm:$0xff]
  %v689 = vld [vmem:[%s6 + $0x20] sm:$0xff]
  %v690 = vld [vmem:[%s6 + $0x28] sm:$0xff]
  %v691 = vld [vmem:[%s6 + $0x30] sm:$0xff]
  %v692 = vld [vmem:[%s6 + $0x38] sm:$0xff]
  %v693 = vld [vmem:[%s7] sm:$0x1]
  %v695 = vlaneseq
  %v696 = vshrl.u32 %v695, 7
  %v697 = vsub.s32 0, %v696
  %v698 = vrot.slane %v693, %v697
  %v715 = vcombine.low %v669, %v670
  %v716 = vcombine.low %v671, %v672
  %v717 = vcombine.low %v673, %v674
  %v718 = vcombine.low %v675, %v676
  %v719 = vcombine.low %v677, %v678
  %v720 = vcombine.low %v679, %v680
  %v721 = vcombine.low %v681, %v682
  %v722 = vcombine.low %v683, %v684
  %v723 = vcombine.low %v698, %v698
  %vm725 = vcmask 523264
  %v726 = vsel %vm725, %v715, 0
  %v728 = vsel %vm725, %v716, 0
  %v730 = vsel %vm725, %v717, 0
  %v732 = vsel %vm725, %v718, 0
  %v734 = vsel %vm725, %v719, 0
  %v736 = vsel %vm725, %v720, 0
  %v738 = vsel %vm725, %v721, 0
  %v740 = vsel %vm725, %v722, 0
  %742 = vmatprep.subr.mxu0 0.0
  %743 = vmatpush1.msra.mxu0 0.0
  %744 = vmatprep.subr.mxu0 0.0
  %745 = vmatpush1.msra.mxu0 0.0
  %746 = vmatprep.subr.mxu0 0.0
  %747 = vmatpush1.msra.mxu0 0.0
  %748 = vmatprep.subr.mxu0 0.0
  %749 = vmatpush1.msra.mxu0 0.0
  %750 = vmatprep.subr.mxu0 0.0
  %751 = vmatpush1.msra.mxu0 0.0
  %752 = vmatprep.subr.mxu0 0.0
  %753 = vmatpush1.msra.mxu0 0.0
  %754 = vmatprep.subr.mxu0 0.0
  %755 = vmatpush1.msra.mxu0 0.0
  %756 = vmatprep.subr.mxu0 0.0
  %757 = vmatpush1.msra.mxu0 0.0
  %758 = vmatprep.subr.mxu0 0.0
  %759 = vmatpush1.msra.mxu0 %v692
  %760 = vmatprep.subr.mxu0 0.0
  %761 = vmatpush1.msra.mxu0 %v691
  %762 = vmatprep.subr.mxu0 0.0
  %763 = vmatpush1.msra.mxu0 %v690
  %764 = vmatprep.subr.mxu0 0.0
  %765 = vmatpush1.msra.mxu0 %v689
  %766 = vmatprep.subr.mxu0 0.0
  %767 = vmatpush1.msra.mxu0 %v688
  %768 = vmatprep.subr.mxu0 0.0
  %769 = vmatpush1.msra.mxu0 %v687
  %770 = vmatprep.subr.mxu0 0.0
  %771 = vmatpush1.msra.mxu0 %v686
  %772 = vmatprep.subr.mxu0 0.0
  %773 = vmatpush1.msra.mxu0 %v685
  %774 = vmatprep.subr.mxu0 0.0
  %775 = vmatpush2.msra.mxu0 0.0
  %776 = vmatprep.subr.mxu0 0.0
  %777 = vmatpush2.msra.mxu0 0.0
  %778 = vmatprep.subr.mxu0 0.0
  %779 = vmatpush2.msra.mxu0 0.0
  %780 = vmatprep.subr.mxu0 0.0
  %781 = vmatpush2.msra.mxu0 0.0
  %782 = vmatprep.subr.mxu0 0.0
  %783 = vmatpush2.msra.mxu0 0.0
  %784 = vmatprep.subr.mxu0 0.0
  %785 = vmatpush2.msra.mxu0 0.0
  %786 = vmatprep.subr.mxu0 0.0
  %787 = vmatpush2.msra.mxu0 0.0
  %788 = vmatprep.subr.mxu0 0.0
  %789 = vmatpush2.msra.mxu0 0.0
  %790 = vmatprep.subr.mxu0 0.0
  %791 = vmatpush2.msra.mxu0 0.0
  %792 = vmatprep.subr.mxu0 0.0
  %793 = vmatpush2.msra.mxu0 0.0
  %794 = vmatprep.subr.mxu0 0.0
  %795 = vmatpush2.msra.mxu0 0.0
  %796 = vmatprep.subr.mxu0 0.0
  %797 = vmatpush2.msra.mxu0 0.0
  %798 = vmatprep.subr.mxu0 0.0
  %799 = vmatpush2.msra.mxu0 0.0
  %800 = vmatprep.subr.mxu0 0.0
  %801 = vmatpush2.msra.mxu0 0.0
  %802 = vmatprep.subr.mxu0 0.0
  %803 = vmatpush2.msra.mxu0 0.0
  %804 = vmatprep.subr.mxu0 0.0
  %805 = vmatpush2.msra.mxu0 0.0
  %806 = vmatprep.mubr.f32.mxu0 0.0
  %807 = vmatmul.mubr.f32.gmra.mxu0 %v726
  %v808 = vpop.f32.mrf.mxu0
  %v809 = vadd.f32 %v723, %v808
  %v810 = vpop.f32.mrf.mxu0
  %811 = vmatprep.mubr.f32.mxu0 0.0
  %812 = vmatmul.mubr.f32.gmra.mxu0 %v728
  %v813 = vpop.f32.mrf.mxu0
  %v814 = vadd.f32 %v723, %v813
  %v815 = vpop.f32.mrf.mxu0
  %816 = vmatprep.mubr.f32.mxu0 0.0
  %817 = vmatmul.mubr.f32.gmra.mxu0 %v730
  %v818 = vpop.f32.mrf.mxu0
  %v819 = vadd.f32 %v723, %v818
  %v820 = vpop.f32.mrf.mxu0
  %821 = vmatprep.mubr.f32.mxu0 0.0
  %822 = vmatmul.mubr.f32.gmra.mxu0 %v732
  %v823 = vpop.f32.mrf.mxu0
  %v824 = vadd.f32 %v723, %v823
  %v825 = vpop.f32.mrf.mxu0
  %826 = vmatprep.mubr.f32.mxu0 0.0
  %827 = vmatmul.mubr.f32.gmra.mxu0 %v734
  %v828 = vpop.f32.mrf.mxu0
  %v829 = vadd.f32 %v723, %v828
  %v830 = vpop.f32.mrf.mxu0
  %831 = vmatprep.mubr.f32.mxu0 0.0
  %832 = vmatmul.mubr.f32.gmra.mxu0 %v736
  %v833 = vpop.f32.mrf.mxu0
  %v834 = vadd.f32 %v723, %v833
  %v835 = vpop.f32.mrf.mxu0
  %836 = vmatprep.mubr.f32.mxu0 0.0
  %837 = vmatmul.mubr.f32.gmra.mxu0 %v738
  %v838 = vpop.f32.mrf.mxu0
  %v839 = vadd.f32 %v723, %v838
  %v840 = vpop.f32.mrf.mxu0
  %841 = vmatprep.mubr.f32.mxu0 0.0
  %842 = vmatmul.mubr.f32.gmra.mxu0 %v740
  %v843 = vpop.f32.mrf.mxu0
  %v844 = vadd.f32 %v723, %v843
  %v845 = vpop.f32.mrf.mxu0
  %846 = vdwg.mxu0
  %v855 = vcombine.high %v809, %v809
  %v856 = vcombine.high %v814, %v814
  %v857 = vcombine.high %v819, %v819
  %v858 = vcombine.high %v824, %v824
  %v859 = vcombine.high %v829, %v829
  %v860 = vcombine.high %v834, %v834
  %v861 = vcombine.high %v839, %v839
  %v862 = vcombine.high %v844, %v844
  %vm871 = vcmask 60416
  %v872 = vsel %vm871, %v809, 0.0
  %v873 = vrot.slane %v872, 4
  %v874 = vadd.f32 %v872, %v873
  %v875 = vrot.slane %v874, 2
  %v876 = vadd.f32 %v874, %v875
  %v877 = vrot.slane %v876, 1
  %v878 = vadd.f32 %v876, %v877
  %v879 = vsel %vm871, %v855, 0.0
  %v880 = vrot.slane %v879, 4
  %v881 = vadd.f32 %v879, %v880
  %v882 = vrot.slane %v881, 2
  %v883 = vadd.f32 %v881, %v882
  %v884 = vrot.slane %v883, 1
  %v885 = vadd.f32 %v883, %v884
  %v886 = vsel %vm871, %v814, 0.0
  %v887 = vrot.slane %v886, 4
  %v888 = vadd.f32 %v886, %v887
  %v889 = vrot.slane %v888, 2
  %v890 = vadd.f32 %v888, %v889
  %v891 = vrot.slane %v890, 1
  %v892 = vadd.f32 %v890, %v891
  %v893 = vsel %vm871, %v856, 0.0
  %v894 = vrot.slane %v893, 4
  %v895 = vadd.f32 %v893, %v894
  %v896 = vrot.slane %v895, 2
  %v897 = vadd.f32 %v895, %v896
  %v898 = vrot.slane %v897, 1
  %v899 = vadd.f32 %v897, %v898
  %v900 = vsel %vm871, %v819, 0.0
  %v901 = vrot.slane %v900, 4
  %v902 = vadd.f32 %v900, %v901
  %v903 = vrot.slane %v902, 2
  %v904 = vadd.f32 %v902, %v903
  %v905 = vrot.slane %v904, 1
  %v906 = vadd.f32 %v904, %v905
  %v907 = vsel %vm871, %v857, 0.0
  %v908 = vrot.slane %v907, 4
  %v909 = vadd.f32 %v907, %v908
  %v910 = vrot.slane %v909, 2
  %v911 = vadd.f32 %v909, %v910
  %v912 = vrot.slane %v911, 1
  %v913 = vadd.f32 %v911, %v912
  %v914 = vsel %vm871, %v824, 0.0
  %v915 = vrot.slane %v914, 4
  %v916 = vadd.f32 %v914, %v915
  %v917 = vrot.slane %v916, 2
  %v918 = vadd.f32 %v916, %v917
  %v919 = vrot.slane %v918, 1
  %v920 = vadd.f32 %v918, %v919
  %v921 = vsel %vm871, %v858, 0.0
  %v922 = vrot.slane %v921, 4
  %v923 = vadd.f32 %v921, %v922
  %v924 = vrot.slane %v923, 2
  %v925 = vadd.f32 %v923, %v924
  %v926 = vrot.slane %v925, 1
  %v927 = vadd.f32 %v925, %v926
  %v928 = vsel %vm871, %v829, 0.0
  %v929 = vrot.slane %v928, 4
  %v930 = vadd.f32 %v928, %v929
  %v931 = vrot.slane %v930, 2
  %v932 = vadd.f32 %v930, %v931
  %v933 = vrot.slane %v932, 1
  %v934 = vadd.f32 %v932, %v933
  %v935 = vsel %vm871, %v859, 0.0
  %v936 = vrot.slane %v935, 4
  %v937 = vadd.f32 %v935, %v936
  %v938 = vrot.slane %v937, 2
  %v939 = vadd.f32 %v937, %v938
  %v940 = vrot.slane %v939, 1
  %v941 = vadd.f32 %v939, %v940
  %v942 = vsel %vm871, %v834, 0.0
  %v943 = vrot.slane %v942, 4
  %v944 = vadd.f32 %v942, %v943
  %v945 = vrot.slane %v944, 2
  %v946 = vadd.f32 %v944, %v945
  %v947 = vrot.slane %v946, 1
  %v948 = vadd.f32 %v946, %v947
  %v949 = vsel %vm871, %v860, 0.0
  %v950 = vrot.slane %v949, 4
  %v951 = vadd.f32 %v949, %v950
  %v952 = vrot.slane %v951, 2
  %v953 = vadd.f32 %v951, %v952
  %v954 = vrot.slane %v953, 1
  %v955 = vadd.f32 %v953, %v954
  %v956 = vsel %vm871, %v839, 0.0
  %v957 = vrot.slane %v956, 4
  %v958 = vadd.f32 %v956, %v957
  %v959 = vrot.slane %v958, 2
  %v960 = vadd.f32 %v958, %v959
  %v961 = vrot.slane %v960, 1
  %v962 = vadd.f32 %v960, %v961
  %v963 = vsel %vm871, %v861, 0.0
  %v964 = vrot.slane %v963, 4
  %v965 = vadd.f32 %v963, %v964
  %v966 = vrot.slane %v965, 2
  %v967 = vadd.f32 %v965, %v966
  %v968 = vrot.slane %v967, 1
  %v969 = vadd.f32 %v967, %v968
  %v970 = vsel %vm871, %v844, 0.0
  %v971 = vrot.slane %v970, 4
  %v972 = vadd.f32 %v970, %v971
  %v973 = vrot.slane %v972, 2
  %v974 = vadd.f32 %v972, %v973
  %v975 = vrot.slane %v974, 1
  %v976 = vadd.f32 %v974, %v975
  %v977 = vsel %vm871, %v862, 0.0
  %v978 = vrot.slane %v977, 4
  %v979 = vadd.f32 %v977, %v978
  %v980 = vrot.slane %v979, 2
  %v981 = vadd.f32 %v979, %v980
  %v982 = vrot.slane %v981, 1
  %v983 = vadd.f32 %v981, %v982
  %v984 = vadd.f32 %v809, 0.0
  %v985 = vadd.f32 %v855, 0.0
  %v986 = vadd.f32 %v814, 0.0
  %v987 = vadd.f32 %v856, 0.0
  %v988 = vadd.f32 %v819, 0.0
  %v989 = vadd.f32 %v857, 0.0
  %v990 = vadd.f32 %v824, 0.0
  %v991 = vadd.f32 %v858, 0.0
  %v992 = vadd.f32 %v829, 0.0
  %v993 = vadd.f32 %v859, 0.0
  %v994 = vadd.f32 %v834, 0.0
  %v995 = vadd.f32 %v860, 0.0
  %v996 = vadd.f32 %v839, 0.0
  %v997 = vadd.f32 %v861, 0.0
  %v998 = vadd.f32 %v844, 0.0
  %v999 = vadd.f32 %v862, 0.0
  %vm1016 = vcmask 1041409
  %v1017 = vsel %vm1016, %v885, %v878
  %vm1018 = vcmask 1042434
  %v1019 = vsel %vm1018, %v892, %v1017
  %vm1020 = vcmask 1043459
  %v1021 = vsel %vm1020, %v899, %v1019
  %vm1022 = vcmask 1044484
  %v1023 = vsel %vm1022, %v906, %v1021
  %vm1024 = vcmask 1045509
  %v1025 = vsel %vm1024, %v913, %v1023
  %vm1026 = vcmask 1046534
  %v1027 = vsel %vm1026, %v920, %v1025
  %vm1028 = vcmask 1047559
  %v1029 = vsel %vm1028, %v927, %v1027
  %v1030 = vsel %vm1016, %v941, %v934
  %v1031 = vsel %vm1018, %v948, %v1030
  %v1032 = vsel %vm1020, %v955, %v1031
  %v1033 = vsel %vm1022, %v962, %v1032
  %v1034 = vsel %vm1024, %v969, %v1033
  %v1035 = vsel %vm1026, %v976, %v1034
  %v1036 = vsel %vm1028, %v983, %v1035
  %1055 = vset.pattern.permute.xlu0 8
  %1056 = vperm.xlu0 %1055, %v984
  %v1057 = vpop.permute.xlu0 %1056
  %1058 = vset.pattern.permute.xlu0 8
  %1059 = vperm.xlu0 %1058, %v985
  %v1060 = vpop.permute.xlu0 %1059
  %1061 = vset.pattern.permute.xlu0 8
  %1062 = vperm.xlu0 %1061, %v986
  %v1063 = vpop.permute.xlu0 %1062
  %1064 = vset.pattern.permute.xlu0 8
  %1065 = vperm.xlu0 %1064, %v987
  %v1066 = vpop.permute.xlu0 %1065
  %1067 = vset.pattern.permute.xlu0 8
  %1068 = vperm.xlu0 %1067, %v988
  %v1069 = vpop.permute.xlu0 %1068
  %1070 = vset.pattern.permute.xlu0 8
  %1071 = vperm.xlu0 %1070, %v989
  %v1072 = vpop.permute.xlu0 %1071
  %1073 = vset.pattern.permute.xlu0 8
  %1074 = vperm.xlu0 %1073, %v990
  %v1075 = vpop.permute.xlu0 %1074
  %1076 = vset.pattern.permute.xlu0 8
  %1077 = vperm.xlu0 %1076, %v991
  %v1078 = vpop.permute.xlu0 %1077
  %1079 = vset.pattern.permute.xlu0 8
  %1080 = vperm.xlu0 %1079, %v992
  %v1081 = vpop.permute.xlu0 %1080
  %1082 = vset.pattern.permute.xlu0 8
  %1083 = vperm.xlu0 %1082, %v993
  %v1084 = vpop.permute.xlu0 %1083
  %1085 = vset.pattern.permute.xlu0 8
  %1086 = vperm.xlu0 %1085, %v994
  %v1087 = vpop.permute.xlu0 %1086
  %1088 = vset.pattern.permute.xlu0 8
  %1089 = vperm.xlu0 %1088, %v995
  %v1090 = vpop.permute.xlu0 %1089
  %1091 = vset.pattern.permute.xlu0 8
  %1092 = vperm.xlu0 %1091, %v996
  %v1093 = vpop.permute.xlu0 %1092
  %1094 = vset.pattern.permute.xlu0 8
  %1095 = vperm.xlu0 %1094, %v997
  %v1096 = vpop.permute.xlu0 %1095
  %1097 = vset.pattern.permute.xlu0 8
  %1098 = vperm.xlu0 %1097, %v998
  %v1099 = vpop.permute.xlu0 %1098
  %1100 = vset.pattern.permute.xlu0 8
  %1101 = vperm.xlu0 %1100, %v999
  %v1102 = vpop.permute.xlu0 %1101
  %v1103 = vlaneseq
  %v1104 = vand.u32 %v1103, 127
  %v1105 = vadd.s32 %v1104, 4294967288
  %v1106 = vlaneseq
  %v1107 = vshrl.u32 %v1106, 7
  %v1108 = vsub.s32 %v1105, %v1107
  %v1109 = vrot.slane %v1057, %v1108
  %v1110 = vlaneseq
  %v1111 = vshrl.u32 %v1110, 7
  %v1112 = vsub.s32 %v1105, %v1111
  %v1113 = vrot.slane %v1060, %v1112
  %v1114 = vlaneseq
  %v1115 = vshrl.u32 %v1114, 7
  %v1116 = vsub.s32 %v1105, %v1115
  %v1117 = vrot.slane %v1063, %v1116
  %v1118 = vlaneseq
  %v1119 = vshrl.u32 %v1118, 7
  %v1120 = vsub.s32 %v1105, %v1119
  %v1121 = vrot.slane %v1066, %v1120
  %v1122 = vlaneseq
  %v1123 = vshrl.u32 %v1122, 7
  %v1124 = vsub.s32 %v1105, %v1123
  %v1125 = vrot.slane %v1069, %v1124
  %v1126 = vlaneseq
  %v1127 = vshrl.u32 %v1126, 7
  %v1128 = vsub.s32 %v1105, %v1127
  %v1129 = vrot.slane %v1072, %v1128
  %v1130 = vlaneseq
  %v1131 = vshrl.u32 %v1130, 7
  %v1132 = vsub.s32 %v1105, %v1131
  %v1133 = vrot.slane %v1075, %v1132
  %v1134 = vlaneseq
  %v1135 = vshrl.u32 %v1134, 7
  %v1136 = vsub.s32 %v1105, %v1135
  %v1137 = vrot.slane %v1078, %v1136
  %v1138 = vlaneseq
  %v1139 = vshrl.u32 %v1138, 7
  %v1140 = vsub.s32 %v1105, %v1139
  %v1141 = vrot.slane %v1081, %v1140
  %v1142 = vlaneseq
  %v1143 = vshrl.u32 %v1142, 7
  %v1144 = vsub.s32 %v1105, %v1143
  %v1145 = vrot.slane %v1084, %v1144
  %v1146 = vlaneseq
  %v1147 = vshrl.u32 %v1146, 7
  %v1148 = vsub.s32 %v1105, %v1147
  %v1149 = vrot.slane %v1087, %v1148
  %v1150 = vlaneseq
  %v1151 = vshrl.u32 %v1150, 7
  %v1152 = vsub.s32 %v1105, %v1151
  %v1153 = vrot.slane %v1090, %v1152
  %v1154 = vlaneseq
  %v1155 = vshrl.u32 %v1154, 7
  %v1156 = vsub.s32 %v1105, %v1155
  %v1157 = vrot.slane %v1093, %v1156
  %v1158 = vlaneseq
  %v1159 = vshrl.u32 %v1158, 7
  %v1160 = vsub.s32 %v1105, %v1159
  %v1161 = vrot.slane %v1096, %v1160
  %v1162 = vlaneseq
  %v1163 = vshrl.u32 %v1162, 7
  %v1164 = vsub.s32 %v1105, %v1163
  %v1165 = vrot.slane %v1099, %v1164
  %v1166 = vlaneseq
  %v1167 = vshrl.u32 %v1166, 7
  %v1168 = vsub.s32 %v1105, %v1167
  %v1169 = vrot.slane %v1102, %v1168
  %v1170 = vsel %vm1016, %v1113, %v1109
  %v1171 = vsel %vm1018, %v1117, %v1170
  %v1172 = vsel %vm1020, %v1121, %v1171
  %v1173 = vsel %vm1022, %v1125, %v1172
  %v1174 = vsel %vm1024, %v1129, %v1173
  %v1175 = vsel %vm1026, %v1133, %v1174
  %v1176 = vsel %vm1028, %v1137, %v1175
  %v1177 = vsel %vm1016, %v1145, %v1141
  %v1178 = vsel %vm1018, %v1149, %v1177
  %v1179 = vsel %vm1020, %v1153, %v1178
  %v1180 = vsel %vm1022, %v1157, %v1179
  %v1181 = vsel %vm1024, %v1161, %v1180
  %v1182 = vsel %vm1026, %v1165, %v1181
  %v1183 = vsel %vm1028, %v1169, %v1182
  %vm1186 = vcmask 64512
  %v1187 = vsel %vm1186, %v1029, %v1176
  %v1188 = vsel %vm1186, %v1036, %v1183
  %vm1189 = vcmask 97280
  %1190 = vst.msk [vmem:[%s8] sm:$0xff] %vm1189, %v1187
  %1191 = vst.msk [vmem:[%s8 + $0x8] sm:$0xff] %vm1189, %v1188
  // Predicated region
  $region34: #{pgnn_forward.3} parent=0 // pred_check
    _
  $region35: #{pgnn_forward.3} parent=0 // pred_check_branch
    %1193 = sbr.rel (0) target = $region37
  $region36: #{pgnn_forward.3} parent=0 // pred_region
    _
  $region37: #{pgnn_forward.3} parent=0 // pred_fallthru
    _
  // Predicated region
  $region38: #{pgnn_forward.3} parent=0 // pred_check
    _
  $region39: #{pgnn_forward.3} parent=0 // pred_check_branch
    %1195 = sbr.rel (0) target = $region41
  $region40: #{pgnn_forward.3} parent=0 // pred_region
    _
  $region41: #{pgnn_forward.3} parent=0 // pred_fallthru
    _

</llo_original>
